<compile_context>
chip_gen: v7x
topology: tpu7x:2x2x1
jax: 0.10.0
libtpu: 0.0.40
codegen_flags: <defaults>
</compile_context>

<pallas_src>
import math
import numpy as np
import jax
import jax.numpy as jnp
from jax.experimental import pallas as pl
from jax.experimental.pallas import tpu as pltpu  # noqa: F401  (TPU backend assumed)


# ----------------------------- fused forward kernel ---------------------------
def _make_fused_rnn_kernel(T, B, H, num_layers):
    """Build a kernel computing all LSTM layers + masked FC in one invocation."""

    def lstm_cell(pre_gates, h, c, whh):
        # pre_gates already holds x @ W_ih + b (hoisted off the serial path).
        g = pre_gates + jnp.dot(h, whh, preferred_element_type=jnp.float32)  # (B, 4H)
        i = jax.nn.sigmoid(g[:, 0:H])
        f = jax.nn.sigmoid(g[:, H:2 * H])
        gg = jnp.tanh(g[:, 2 * H:3 * H])
        o = jax.nn.sigmoid(g[:, 3 * H:4 * H])
        c_new = f * c + i * gg
        h_new = o * jnp.tanh(c_new)
        return h_new, c_new

    def kernel(*refs):
        # refs: x_flat, (w_ih_t, w_hh_t, b) * num_layers, fc_w_t, fc_b, mask, out
        x_ref = refs[0]
        layer_refs = refs[1:1 + 3 * num_layers]
        fcw_ref, fcb_ref, mask_ref, out_ref = refs[1 + 3 * num_layers:]

        seq = x_ref[...]                                    # (T*B, D_in) time-major
        h = None
        for l in range(num_layers):
            wih = layer_refs[3 * l][...]                    # (D_in, 4H)
            whh = layer_refs[3 * l + 1][...]                # (H, 4H)
            b = layer_refs[3 * l + 2][...]                  # (1, 4H)

            # Hoisted input projection for the entire sequence: one MXU matmul.
            gates_all = jnp.dot(seq, wih, preferred_element_type=jnp.float32) + b

            h = jnp.zeros((B, H), jnp.float32)
            c = jnp.zeros((B, H), jnp.float32)
            hs = []
            for t in range(T):                              # short, fully unrolled
                h, c = lstm_cell(gates_all[t * B:(t + 1) * B, :], h, c, whh)
                hs.append(h)

            if l + 1 < num_layers:
                # next layer's input sequence; stays resident in VMEM
                seq = jnp.concatenate(hs, axis=0)           # (T*B, H)

        # pad_packed_sequence semantics: rows with length < T_max are zero at T_max-1.
        hm = h * mask_ref[...]                              # (B, H)
        out_ref[...] = (
            jnp.dot(hm, fcw_ref[...], preferred_element_type=jnp.float32) + fcb_ref[...]
        ).astype(out_ref.dtype)

    return kernel


# --------------------------------- full model ---------------------------------
def rnn_forward(x_btd, lengths_np, lstm_params, fc_w_t, fc_b, hidden_size):
    """x_btd: (B, T, input_size) batch-first (PyTorch convention).
    lengths_np: host numpy int array (B,).  Returns (B, num_classes)."""
    B, _, D = x_btd.shape
    H = hidden_size
    C = fc_w_t.shape[1]
    t_max = int(lengths_np.max())

    # batch-first -> time-major, flatten time into the sublane axis: (T_max*B, D)
    x_flat = jnp.transpose(x_btd[:, :t_max, :], (1, 0, 2)).reshape(t_max * B, D)
    mask = (jnp.asarray(lengths_np) == t_max).astype(jnp.float32)[:, None]  # (B, 1)

    flat_params = []
    for (w_ih_t, w_hh_t, b) in lstm_params:
        flat_params += [w_ih_t, w_hh_t, b]

    kernel = _make_fused_rnn_kernel(t_max, B, H, len(lstm_params))
    return pl.pallas_call(
        kernel,
        out_shape=jax.ShapeDtypeStruct((B, C), jnp.float32),
        # no grid: every operand lives whole in VMEM (total footprint ~40 KB),
        # the kernel body runs once, only (B, C) goes back to HBM.
    )(x_flat, *flat_params, fc_w_t, fc_b, mask)


# ------------------------------ pure-JAX reference ----------------------------
def ref_forward(x_btd, lengths_np, lstm_params, fc_w_t, fc_b, H):
    t_max = int(lengths_np.max())
    cur = jnp.transpose(x_btd[:, :t_max, :], (1, 0, 2))
    B = cur.shape[1]
    for (w_ih_t, w_hh_t, b) in lstm_params:
        def step(carry, x_t):
            h, c = carry
            gates = x_t @ w_ih_t + h @ w_hh_t + b
            i = jax.nn.sigmoid(gates[:, 0:H])
            f = jax.nn.sigmoid(gates[:, H:2 * H])
            g = jnp.tanh(gates[:, 2 * H:3 * H])
            o = jax.nn.sigmoid(gates[:, 3 * H:4 * H])
            c = f * c + i * g
            h = o * jnp.tanh(c)
            return (h, c), h
        init = (jnp.zeros((B, H), jnp.float32), jnp.zeros((B, H), jnp.float32))
        _, cur = jax.lax.scan(step, init, cur)
    last = cur[-1]
    mask = (jnp.asarray(lengths_np) == t_max).astype(jnp.float32)[:, None]
    return (last * mask) @ fc_w_t + fc_b


# ------------------------------------ main ------------------------------------
if __name__ == "__main__":
    # model hyper-params
    input_size, hidden_size, num_layers, num_classes = 16, 32, 2, 10
    B, T = 8, 8

    key = jax.random.PRNGKey(0)
    keys = iter(jax.random.split(key, 64))

    # Deterministic parameter init (PyTorch LSTM/Linear: U(-1/sqrt(H), 1/sqrt(H)))
    k = 1.0 / math.sqrt(hidden_size)
    lstm_params = []
    for layer in range(num_layers):
        d_in = input_size if layer == 0 else hidden_size
        w_ih = jax.random.uniform(next(keys), (4 * hidden_size, d_in), jnp.float32, -k, k)
        w_hh = jax.random.uniform(next(keys), (4 * hidden_size, hidden_size), jnp.float32, -k, k)
        b_ih = jax.random.uniform(next(keys), (4 * hidden_size,), jnp.float32, -k, k)
        b_hh = jax.random.uniform(next(keys), (4 * hidden_size,), jnp.float32, -k, k)
        # pre-transpose weights, combine biases -> (1, 4H) for broadcast in kernel
        lstm_params.append((w_ih.T, w_hh.T, (b_ih + b_hh)[None, :]))

    kf = 1.0 / math.sqrt(hidden_size)
    fc_w = jax.random.uniform(next(keys), (num_classes, hidden_size), jnp.float32, -kf, kf)
    fc_b = jax.random.uniform(next(keys), (num_classes,), jnp.float32, -kf, kf)
    fc_w_t = fc_w.T                       # (H, C)
    fc_b2 = fc_b[None, :]                 # (1, C)

    # Example inputs
    x = jax.random.normal(next(keys), (B, T, input_size), jnp.float32)
    lengths = np.array([8, 5, 8, 3, 6, 8, 2, 7], dtype=np.int32)  # host (like lengths.to('cpu'))

    out = rnn_forward(x, lengths, lstm_params, fc_w_t, fc_b2, hidden_size)
    out = jax.block_until_ready(out)

    ref = ref_forward(x, lengths, lstm_params, fc_w_t, fc_b2, hidden_size)
    ref = jax.block_until_ready(ref)

    assert out.shape == (B, num_classes)
    np.testing.assert_allclose(np.asarray(out), np.asarray(ref), rtol=1e-4, atol=1e-5)
    print("KERNEL_OK")
</pallas_src>

<mosaic_0001>
module attributes {stable_mosaic.version = 11 : i64} {
  func.func @kernel(%arg0: memref<64x16xf32, #tpu.memory_space<vmem>>, %arg1: memref<16x128xf32, #tpu.memory_space<vmem>>, %arg2: memref<32x128xf32, #tpu.memory_space<vmem>>, %arg3: memref<1x128xf32, #tpu.memory_space<vmem>>, %arg4: memref<32x128xf32, #tpu.memory_space<vmem>>, %arg5: memref<32x128xf32, #tpu.memory_space<vmem>>, %arg6: memref<1x128xf32, #tpu.memory_space<vmem>>, %arg7: memref<32x10xf32, #tpu.memory_space<vmem>>, %arg8: memref<1x10xf32, #tpu.memory_space<vmem>>, %arg9: memref<8x1xf32, #tpu.memory_space<vmem>>, %arg10: memref<8x10xf32, #tpu.memory_space<vmem>>) attributes {dimension_semantics = [], scalar_prefetch = 0 : i64, scratch_operands = 0 : i64, tpu.core_type = #tpu.core_type<tc>} {
    %c0 = arith.constant 0 : index
    %c0_0 = arith.constant 0 : index
    %0 = vector.load %arg0[%c0, %c0_0] : memref<64x16xf32, #tpu.memory_space<vmem>>, vector<64x16xf32>
    %c0_1 = arith.constant 0 : index
    %c0_2 = arith.constant 0 : index
    %1 = vector.load %arg1[%c0_1, %c0_2] : memref<16x128xf32, #tpu.memory_space<vmem>>, vector<16x128xf32>
    %c0_3 = arith.constant 0 : index
    %c0_4 = arith.constant 0 : index
    %2 = vector.load %arg2[%c0_3, %c0_4] : memref<32x128xf32, #tpu.memory_space<vmem>>, vector<32x128xf32>
    %c0_5 = arith.constant 0 : index
    %c0_6 = arith.constant 0 : index
    %3 = vector.load %arg3[%c0_5, %c0_6] : memref<1x128xf32, #tpu.memory_space<vmem>>, vector<1x128xf32>
    %cst = arith.constant dense<0.000000e+00> : vector<64x128xf32>
    %4 = tpu.matmul %0, %1, %cst {dimension_numbers = #tpu.dot_dimension_numbers<[1], [0], [0], [1], [0, 0, 1, 1], [], []>} : vector<64x16xf32>, vector<16x128xf32>, vector<64x128xf32> -> vector<64x128xf32>
    %5 = vector.broadcast %3 : vector<1x128xf32> to vector<64x128xf32>
    %6 = arith.addf %4, %5 : vector<64x128xf32>
    %cst_7 = arith.constant 0.000000e+00 : f32
    %7 = vector.broadcast %cst_7 : f32 to vector<8x32xf32>
    %cst_8 = arith.constant 0.000000e+00 : f32
    %8 = vector.broadcast %cst_8 : f32 to vector<8x32xf32>
    %9 = vector.extract_strided_slice %6 {offsets = [0, 0], sizes = [8, 128], strides = [1, 1]} : vector<64x128xf32> to vector<8x128xf32>
    %cst_9 = arith.constant dense<0.000000e+00> : vector<8x128xf32>
    %10 = tpu.matmul %7, %2, %cst_9 {dimension_numbers = #tpu.dot_dimension_numbers<[1], [0], [0], [1], [0, 0, 1, 1], [], []>} : vector<8x32xf32>, vector<32x128xf32>, vector<8x128xf32> -> vector<8x128xf32>
    %11 = arith.addf %9, %10 : vector<8x128xf32>
    %12 = vector.extract_strided_slice %11 {offsets = [0, 0], sizes = [8, 32], strides = [1, 1]} : vector<8x128xf32> to vector<8x32xf32>
    %13 = arith.negf %12 : vector<8x32xf32>
    %14 = math.exp %13 : vector<8x32xf32>
    %cst_10 = arith.constant 1.000000e+00 : f32
    %15 = vector.broadcast %cst_10 : f32 to vector<8x32xf32>
    %16 = arith.addf %15, %14 : vector<8x32xf32>
    %17 = arith.divf %15, %16 : vector<8x32xf32>
    %18 = vector.extract_strided_slice %11 {offsets = [0, 32], sizes = [8, 32], strides = [1, 1]} : vector<8x128xf32> to vector<8x32xf32>
    %19 = arith.negf %18 : vector<8x32xf32>
    %20 = math.exp %19 : vector<8x32xf32>
    %cst_11 = arith.constant 1.000000e+00 : f32
    %21 = vector.broadcast %cst_11 : f32 to vector<8x32xf32>
    %22 = arith.addf %21, %20 : vector<8x32xf32>
    %23 = arith.divf %21, %22 : vector<8x32xf32>
    %24 = vector.extract_strided_slice %11 {offsets = [0, 64], sizes = [8, 32], strides = [1, 1]} : vector<8x128xf32> to vector<8x32xf32>
    %25 = math.tanh %24 : vector<8x32xf32>
    %26 = vector.extract_strided_slice %11 {offsets = [0, 96], sizes = [8, 32], strides = [1, 1]} : vector<8x128xf32> to vector<8x32xf32>
    %27 = arith.negf %26 : vector<8x32xf32>
    %28 = math.exp %27 : vector<8x32xf32>
    %cst_12 = arith.constant 1.000000e+00 : f32
    %29 = vector.broadcast %cst_12 : f32 to vector<8x32xf32>
    %30 = arith.addf %29, %28 : vector<8x32xf32>
    %31 = arith.divf %29, %30 : vector<8x32xf32>
    %32 = arith.mulf %23, %8 : vector<8x32xf32>
    %33 = arith.mulf %17, %25 : vector<8x32xf32>
    %34 = arith.addf %32, %33 : vector<8x32xf32>
    %35 = math.tanh %34 : vector<8x32xf32>
    %36 = arith.mulf %31, %35 : vector<8x32xf32>
    %37 = vector.extract_strided_slice %6 {offsets = [8, 0], sizes = [8, 128], strides = [1, 1]} : vector<64x128xf32> to vector<8x128xf32>
    %cst_13 = arith.constant dense<0.000000e+00> : vector<8x128xf32>
    %38 = tpu.matmul %36, %2, %cst_13 {dimension_numbers = #tpu.dot_dimension_numbers<[1], [0], [0], [1], [0, 0, 1, 1], [], []>} : vector<8x32xf32>, vector<32x128xf32>, vector<8x128xf32> -> vector<8x128xf32>
    %39 = arith.addf %37, %38 : vector<8x128xf32>
    %40 = vector.extract_strided_slice %39 {offsets = [0, 0], sizes = [8, 32], strides = [1, 1]} : vector<8x128xf32> to vector<8x32xf32>
    %41 = arith.negf %40 : vector<8x32xf32>
    %42 = math.exp %41 : vector<8x32xf32>
    %cst_14 = arith.constant 1.000000e+00 : f32
    %43 = vector.broadcast %cst_14 : f32 to vector<8x32xf32>
    %44 = arith.addf %43, %42 : vector<8x32xf32>
    %45 = arith.divf %43, %44 : vector<8x32xf32>
    %46 = vector.extract_strided_slice %39 {offsets = [0, 32], sizes = [8, 32], strides = [1, 1]} : vector<8x128xf32> to vector<8x32xf32>
    %47 = arith.negf %46 : vector<8x32xf32>
    %48 = math.exp %47 : vector<8x32xf32>
    %cst_15 = arith.constant 1.000000e+00 : f32
    %49 = vector.broadcast %cst_15 : f32 to vector<8x32xf32>
    %50 = arith.addf %49, %48 : vector<8x32xf32>
    %51 = arith.divf %49, %50 : vector<8x32xf32>
    %52 = vector.extract_strided_slice %39 {offsets = [0, 64], sizes = [8, 32], strides = [1, 1]} : vector<8x128xf32> to vector<8x32xf32>
    %53 = math.tanh %52 : vector<8x32xf32>
    %54 = vector.extract_strided_slice %39 {offsets = [0, 96], sizes = [8, 32], strides = [1, 1]} : vector<8x128xf32> to vector<8x32xf32>
    %55 = arith.negf %54 : vector<8x32xf32>
    %56 = math.exp %55 : vector<8x32xf32>
    %cst_16 = arith.constant 1.000000e+00 : f32
    %57 = vector.broadcast %cst_16 : f32 to vector<8x32xf32>
    %58 = arith.addf %57, %56 : vector<8x32xf32>
    %59 = arith.divf %57, %58 : vector<8x32xf32>
    %60 = arith.mulf %51, %34 : vector<8x32xf32>
    %61 = arith.mulf %45, %53 : vector<8x32xf32>
    %62 = arith.addf %60, %61 : vector<8x32xf32>
    %63 = math.tanh %62 : vector<8x32xf32>
    %64 = arith.mulf %59, %63 : vector<8x32xf32>
    %65 = vector.extract_strided_slice %6 {offsets = [16, 0], sizes = [8, 128], strides = [1, 1]} : vector<64x128xf32> to vector<8x128xf32>
    %cst_17 = arith.constant dense<0.000000e+00> : vector<8x128xf32>
    %66 = tpu.matmul %64, %2, %cst_17 {dimension_numbers = #tpu.dot_dimension_numbers<[1], [0], [0], [1], [0, 0, 1, 1], [], []>} : vector<8x32xf32>, vector<32x128xf32>, vector<8x128xf32> -> vector<8x128xf32>
    %67 = arith.addf %65, %66 : vector<8x128xf32>
    %68 = vector.extract_strided_slice %67 {offsets = [0, 0], sizes = [8, 32], strides = [1, 1]} : vector<8x128xf32> to vector<8x32xf32>
    %69 = arith.negf %68 : vector<8x32xf32>
    %70 = math.exp %69 : vector<8x32xf32>
    %cst_18 = arith.constant 1.000000e+00 : f32
    %71 = vector.broadcast %cst_18 : f32 to vector<8x32xf32>
    %72 = arith.addf %71, %70 : vector<8x32xf32>
    %73 = arith.divf %71, %72 : vector<8x32xf32>
    %74 = vector.extract_strided_slice %67 {offsets = [0, 32], sizes = [8, 32], strides = [1, 1]} : vector<8x128xf32> to vector<8x32xf32>
    %75 = arith.negf %74 : vector<8x32xf32>
    %76 = math.exp %75 : vector<8x32xf32>
    %cst_19 = arith.constant 1.000000e+00 : f32
    %77 = vector.broadcast %cst_19 : f32 to vector<8x32xf32>
    %78 = arith.addf %77, %76 : vector<8x32xf32>
    %79 = arith.divf %77, %78 : vector<8x32xf32>
    %80 = vector.extract_strided_slice %67 {offsets = [0, 64], sizes = [8, 32], strides = [1, 1]} : vector<8x128xf32> to vector<8x32xf32>
    %81 = math.tanh %80 : vector<8x32xf32>
    %82 = vector.extract_strided_slice %67 {offsets = [0, 96], sizes = [8, 32], strides = [1, 1]} : vector<8x128xf32> to vector<8x32xf32>
    %83 = arith.negf %82 : vector<8x32xf32>
    %84 = math.exp %83 : vector<8x32xf32>
    %cst_20 = arith.constant 1.000000e+00 : f32
    %85 = vector.broadcast %cst_20 : f32 to vector<8x32xf32>
    %86 = arith.addf %85, %84 : vector<8x32xf32>
    %87 = arith.divf %85, %86 : vector<8x32xf32>
    %88 = arith.mulf %79, %62 : vector<8x32xf32>
    %89 = arith.mulf %73, %81 : vector<8x32xf32>
    %90 = arith.addf %88, %89 : vector<8x32xf32>
    %91 = math.tanh %90 : vector<8x32xf32>
    %92 = arith.mulf %87, %91 : vector<8x32xf32>
    %93 = vector.extract_strided_slice %6 {offsets = [24, 0], sizes = [8, 128], strides = [1, 1]} : vector<64x128xf32> to vector<8x128xf32>
    %cst_21 = arith.constant dense<0.000000e+00> : vector<8x128xf32>
    %94 = tpu.matmul %92, %2, %cst_21 {dimension_numbers = #tpu.dot_dimension_numbers<[1], [0], [0], [1], [0, 0, 1, 1], [], []>} : vector<8x32xf32>, vector<32x128xf32>, vector<8x128xf32> -> vector<8x128xf32>
    %95 = arith.addf %93, %94 : vector<8x128xf32>
    %96 = vector.extract_strided_slice %95 {offsets = [0, 0], sizes = [8, 32], strides = [1, 1]} : vector<8x128xf32> to vector<8x32xf32>
    %97 = arith.negf %96 : vector<8x32xf32>
    %98 = math.exp %97 : vector<8x32xf32>
    %cst_22 = arith.constant 1.000000e+00 : f32
    %99 = vector.broadcast %cst_22 : f32 to vector<8x32xf32>
    %100 = arith.addf %99, %98 : vector<8x32xf32>
    %101 = arith.divf %99, %100 : vector<8x32xf32>
    %102 = vector.extract_strided_slice %95 {offsets = [0, 32], sizes = [8, 32], strides = [1, 1]} : vector<8x128xf32> to vector<8x32xf32>
    %103 = arith.negf %102 : vector<8x32xf32>
    %104 = math.exp %103 : vector<8x32xf32>
    %cst_23 = arith.constant 1.000000e+00 : f32
    %105 = vector.broadcast %cst_23 : f32 to vector<8x32xf32>
    %106 = arith.addf %105, %104 : vector<8x32xf32>
    %107 = arith.divf %105, %106 : vector<8x32xf32>
    %108 = vector.extract_strided_slice %95 {offsets = [0, 64], sizes = [8, 32], strides = [1, 1]} : vector<8x128xf32> to vector<8x32xf32>
    %109 = math.tanh %108 : vector<8x32xf32>
    %110 = vector.extract_strided_slice %95 {offsets = [0, 96], sizes = [8, 32], strides = [1, 1]} : vector<8x128xf32> to vector<8x32xf32>
    %111 = arith.negf %110 : vector<8x32xf32>
    %112 = math.exp %111 : vector<8x32xf32>
    %cst_24 = arith.constant 1.000000e+00 : f32
    %113 = vector.broadcast %cst_24 : f32 to vector<8x32xf32>
    %114 = arith.addf %113, %112 : vector<8x32xf32>
    %115 = arith.divf %113, %114 : vector<8x32xf32>
    %116 = arith.mulf %107, %90 : vector<8x32xf32>
    %117 = arith.mulf %101, %109 : vector<8x32xf32>
    %118 = arith.addf %116, %117 : vector<8x32xf32>
    %119 = math.tanh %118 : vector<8x32xf32>
    %120 = arith.mulf %115, %119 : vector<8x32xf32>
    %121 = vector.extract_strided_slice %6 {offsets = [32, 0], sizes = [8, 128], strides = [1, 1]} : vector<64x128xf32> to vector<8x128xf32>
    %cst_25 = arith.constant dense<0.000000e+00> : vector<8x128xf32>
    %122 = tpu.matmul %120, %2, %cst_25 {dimension_numbers = #tpu.dot_dimension_numbers<[1], [0], [0], [1], [0, 0, 1, 1], [], []>} : vector<8x32xf32>, vector<32x128xf32>, vector<8x128xf32> -> vector<8x128xf32>
    %123 = arith.addf %121, %122 : vector<8x128xf32>
    %124 = vector.extract_strided_slice %123 {offsets = [0, 0], sizes = [8, 32], strides = [1, 1]} : vector<8x128xf32> to vector<8x32xf32>
    %125 = arith.negf %124 : vector<8x32xf32>
    %126 = math.exp %125 : vector<8x32xf32>
    %cst_26 = arith.constant 1.000000e+00 : f32
    %127 = vector.broadcast %cst_26 : f32 to vector<8x32xf32>
    %128 = arith.addf %127, %126 : vector<8x32xf32>
    %129 = arith.divf %127, %128 : vector<8x32xf32>
    %130 = vector.extract_strided_slice %123 {offsets = [0, 32], sizes = [8, 32], strides = [1, 1]} : vector<8x128xf32> to vector<8x32xf32>
    %131 = arith.negf %130 : vector<8x32xf32>
    %132 = math.exp %131 : vector<8x32xf32>
    %cst_27 = arith.constant 1.000000e+00 : f32
    %133 = vector.broadcast %cst_27 : f32 to vector<8x32xf32>
    %134 = arith.addf %133, %132 : vector<8x32xf32>
    %135 = arith.divf %133, %134 : vector<8x32xf32>
    %136 = vector.extract_strided_slice %123 {offsets = [0, 64], sizes = [8, 32], strides = [1, 1]} : vector<8x128xf32> to vector<8x32xf32>
    %137 = math.tanh %136 : vector<8x32xf32>
    %138 = vector.extract_strided_slice %123 {offsets = [0, 96], sizes = [8, 32], strides = [1, 1]} : vector<8x128xf32> to vector<8x32xf32>
    %139 = arith.negf %138 : vector<8x32xf32>
    %140 = math.exp %139 : vector<8x32xf32>
    %cst_28 = arith.constant 1.000000e+00 : f32
    %141 = vector.broadcast %cst_28 : f32 to vector<8x32xf32>
    %142 = arith.addf %141, %140 : vector<8x32xf32>
    %143 = arith.divf %141, %142 : vector<8x32xf32>
    %144 = arith.mulf %135, %118 : vector<8x32xf32>
    %145 = arith.mulf %129, %137 : vector<8x32xf32>
    %146 = arith.addf %144, %145 : vector<8x32xf32>
    %147 = math.tanh %146 : vector<8x32xf32>
    %148 = arith.mulf %143, %147 : vector<8x32xf32>
    %149 = vector.extract_strided_slice %6 {offsets = [40, 0], sizes = [8, 128], strides = [1, 1]} : vector<64x128xf32> to vector<8x128xf32>
    %cst_29 = arith.constant dense<0.000000e+00> : vector<8x128xf32>
    %150 = tpu.matmul %148, %2, %cst_29 {dimension_numbers = #tpu.dot_dimension_numbers<[1], [0], [0], [1], [0, 0, 1, 1], [], []>} : vector<8x32xf32>, vector<32x128xf32>, vector<8x128xf32> -> vector<8x128xf32>
    %151 = arith.addf %149, %150 : vector<8x128xf32>
    %152 = vector.extract_strided_slice %151 {offsets = [0, 0], sizes = [8, 32], strides = [1, 1]} : vector<8x128xf32> to vector<8x32xf32>
    %153 = arith.negf %152 : vector<8x32xf32>
    %154 = math.exp %153 : vector<8x32xf32>
    %cst_30 = arith.constant 1.000000e+00 : f32
    %155 = vector.broadcast %cst_30 : f32 to vector<8x32xf32>
    %156 = arith.addf %155, %154 : vector<8x32xf32>
    %157 = arith.divf %155, %156 : vector<8x32xf32>
    %158 = vector.extract_strided_slice %151 {offsets = [0, 32], sizes = [8, 32], strides = [1, 1]} : vector<8x128xf32> to vector<8x32xf32>
    %159 = arith.negf %158 : vector<8x32xf32>
    %160 = math.exp %159 : vector<8x32xf32>
    %cst_31 = arith.constant 1.000000e+00 : f32
    %161 = vector.broadcast %cst_31 : f32 to vector<8x32xf32>
    %162 = arith.addf %161, %160 : vector<8x32xf32>
    %163 = arith.divf %161, %162 : vector<8x32xf32>
    %164 = vector.extract_strided_slice %151 {offsets = [0, 64], sizes = [8, 32], strides = [1, 1]} : vector<8x128xf32> to vector<8x32xf32>
    %165 = math.tanh %164 : vector<8x32xf32>
    %166 = vector.extract_strided_slice %151 {offsets = [0, 96], sizes = [8, 32], strides = [1, 1]} : vector<8x128xf32> to vector<8x32xf32>
    %167 = arith.negf %166 : vector<8x32xf32>
    %168 = math.exp %167 : vector<8x32xf32>
    %cst_32 = arith.constant 1.000000e+00 : f32
    %169 = vector.broadcast %cst_32 : f32 to vector<8x32xf32>
    %170 = arith.addf %169, %168 : vector<8x32xf32>
    %171 = arith.divf %169, %170 : vector<8x32xf32>
    %172 = arith.mulf %163, %146 : vector<8x32xf32>
    %173 = arith.mulf %157, %165 : vector<8x32xf32>
    %174 = arith.addf %172, %173 : vector<8x32xf32>
    %175 = math.tanh %174 : vector<8x32xf32>
    %176 = arith.mulf %171, %175 : vector<8x32xf32>
    %177 = vector.extract_strided_slice %6 {offsets = [48, 0], sizes = [8, 128], strides = [1, 1]} : vector<64x128xf32> to vector<8x128xf32>
    %cst_33 = arith.constant dense<0.000000e+00> : vector<8x128xf32>
    %178 = tpu.matmul %176, %2, %cst_33 {dimension_numbers = #tpu.dot_dimension_numbers<[1], [0], [0], [1], [0, 0, 1, 1], [], []>} : vector<8x32xf32>, vector<32x128xf32>, vector<8x128xf32> -> vector<8x128xf32>
    %179 = arith.addf %177, %178 : vector<8x128xf32>
    %180 = vector.extract_strided_slice %179 {offsets = [0, 0], sizes = [8, 32], strides = [1, 1]} : vector<8x128xf32> to vector<8x32xf32>
    %181 = arith.negf %180 : vector<8x32xf32>
    %182 = math.exp %181 : vector<8x32xf32>
    %cst_34 = arith.constant 1.000000e+00 : f32
    %183 = vector.broadcast %cst_34 : f32 to vector<8x32xf32>
    %184 = arith.addf %183, %182 : vector<8x32xf32>
    %185 = arith.divf %183, %184 : vector<8x32xf32>
    %186 = vector.extract_strided_slice %179 {offsets = [0, 32], sizes = [8, 32], strides = [1, 1]} : vector<8x128xf32> to vector<8x32xf32>
    %187 = arith.negf %186 : vector<8x32xf32>
    %188 = math.exp %187 : vector<8x32xf32>
    %cst_35 = arith.constant 1.000000e+00 : f32
    %189 = vector.broadcast %cst_35 : f32 to vector<8x32xf32>
    %190 = arith.addf %189, %188 : vector<8x32xf32>
    %191 = arith.divf %189, %190 : vector<8x32xf32>
    %192 = vector.extract_strided_slice %179 {offsets = [0, 64], sizes = [8, 32], strides = [1, 1]} : vector<8x128xf32> to vector<8x32xf32>
    %193 = math.tanh %192 : vector<8x32xf32>
    %194 = vector.extract_strided_slice %179 {offsets = [0, 96], sizes = [8, 32], strides = [1, 1]} : vector<8x128xf32> to vector<8x32xf32>
    %195 = arith.negf %194 : vector<8x32xf32>
    %196 = math.exp %195 : vector<8x32xf32>
    %cst_36 = arith.constant 1.000000e+00 : f32
    %197 = vector.broadcast %cst_36 : f32 to vector<8x32xf32>
    %198 = arith.addf %197, %196 : vector<8x32xf32>
    %199 = arith.divf %197, %198 : vector<8x32xf32>
    %200 = arith.mulf %191, %174 : vector<8x32xf32>
    %201 = arith.mulf %185, %193 : vector<8x32xf32>
    %202 = arith.addf %200, %201 : vector<8x32xf32>
    %203 = math.tanh %202 : vector<8x32xf32>
    %204 = arith.mulf %199, %203 : vector<8x32xf32>
    %205 = vector.extract_strided_slice %6 {offsets = [56, 0], sizes = [8, 128], strides = [1, 1]} : vector<64x128xf32> to vector<8x128xf32>
    %cst_37 = arith.constant dense<0.000000e+00> : vector<8x128xf32>
    %206 = tpu.matmul %204, %2, %cst_37 {dimension_numbers = #tpu.dot_dimension_numbers<[1], [0], [0], [1], [0, 0, 1, 1], [], []>} : vector<8x32xf32>, vector<32x128xf32>, vector<8x128xf32> -> vector<8x128xf32>
    %207 = arith.addf %205, %206 : vector<8x128xf32>
    %208 = vector.extract_strided_slice %207 {offsets = [0, 0], sizes = [8, 32], strides = [1, 1]} : vector<8x128xf32> to vector<8x32xf32>
    %209 = arith.negf %208 : vector<8x32xf32>
    %210 = math.exp %209 : vector<8x32xf32>
    %cst_38 = arith.constant 1.000000e+00 : f32
    %211 = vector.broadcast %cst_38 : f32 to vector<8x32xf32>
    %212 = arith.addf %211, %210 : vector<8x32xf32>
    %213 = arith.divf %211, %212 : vector<8x32xf32>
    %214 = vector.extract_strided_slice %207 {offsets = [0, 32], sizes = [8, 32], strides = [1, 1]} : vector<8x128xf32> to vector<8x32xf32>
    %215 = arith.negf %214 : vector<8x32xf32>
    %216 = math.exp %215 : vector<8x32xf32>
    %cst_39 = arith.constant 1.000000e+00 : f32
    %217 = vector.broadcast %cst_39 : f32 to vector<8x32xf32>
    %218 = arith.addf %217, %216 : vector<8x32xf32>
    %219 = arith.divf %217, %218 : vector<8x32xf32>
    %220 = vector.extract_strided_slice %207 {offsets = [0, 64], sizes = [8, 32], strides = [1, 1]} : vector<8x128xf32> to vector<8x32xf32>
    %221 = math.tanh %220 : vector<8x32xf32>
    %222 = vector.extract_strided_slice %207 {offsets = [0, 96], sizes = [8, 32], strides = [1, 1]} : vector<8x128xf32> to vector<8x32xf32>
    %223 = arith.negf %222 : vector<8x32xf32>
    %224 = math.exp %223 : vector<8x32xf32>
    %cst_40 = arith.constant 1.000000e+00 : f32
    %225 = vector.broadcast %cst_40 : f32 to vector<8x32xf32>
    %226 = arith.addf %225, %224 : vector<8x32xf32>
    %227 = arith.divf %225, %226 : vector<8x32xf32>
    %228 = arith.mulf %219, %202 : vector<8x32xf32>
    %229 = arith.mulf %213, %221 : vector<8x32xf32>
    %230 = arith.addf %228, %229 : vector<8x32xf32>
    %231 = math.tanh %230 : vector<8x32xf32>
    %232 = arith.mulf %227, %231 : vector<8x32xf32>
    %233 = tpu.concatenate %36, %64, %92, %120, %148, %176, %204, %232 in 0 : vector<8x32xf32>, vector<8x32xf32>, vector<8x32xf32>, vector<8x32xf32>, vector<8x32xf32>, vector<8x32xf32>, vector<8x32xf32>, vector<8x32xf32> -> vector<64x32xf32>
    %c0_41 = arith.constant 0 : index
    %c0_42 = arith.constant 0 : index
    %234 = vector.load %arg4[%c0_41, %c0_42] : memref<32x128xf32, #tpu.memory_space<vmem>>, vector<32x128xf32>
    %c0_43 = arith.constant 0 : index
    %c0_44 = arith.constant 0 : index
    %235 = vector.load %arg5[%c0_43, %c0_44] : memref<32x128xf32, #tpu.memory_space<vmem>>, vector<32x128xf32>
    %c0_45 = arith.constant 0 : index
    %c0_46 = arith.constant 0 : index
    %236 = vector.load %arg6[%c0_45, %c0_46] : memref<1x128xf32, #tpu.memory_space<vmem>>, vector<1x128xf32>
    %cst_47 = arith.constant dense<0.000000e+00> : vector<64x128xf32>
    %237 = tpu.matmul %233, %234, %cst_47 {dimension_numbers = #tpu.dot_dimension_numbers<[1], [0], [0], [1], [0, 0, 1, 1], [], []>} : vector<64x32xf32>, vector<32x128xf32>, vector<64x128xf32> -> vector<64x128xf32>
    %238 = vector.broadcast %236 : vector<1x128xf32> to vector<64x128xf32>
    %239 = arith.addf %237, %238 : vector<64x128xf32>
    %cst_48 = arith.constant 0.000000e+00 : f32
    %240 = vector.broadcast %cst_48 : f32 to vector<8x32xf32>
    %cst_49 = arith.constant 0.000000e+00 : f32
    %241 = vector.broadcast %cst_49 : f32 to vector<8x32xf32>
    %242 = vector.extract_strided_slice %239 {offsets = [0, 0], sizes = [8, 128], strides = [1, 1]} : vector<64x128xf32> to vector<8x128xf32>
    %cst_50 = arith.constant dense<0.000000e+00> : vector<8x128xf32>
    %243 = tpu.matmul %240, %235, %cst_50 {dimension_numbers = #tpu.dot_dimension_numbers<[1], [0], [0], [1], [0, 0, 1, 1], [], []>} : vector<8x32xf32>, vector<32x128xf32>, vector<8x128xf32> -> vector<8x128xf32>
    %244 = arith.addf %242, %243 : vector<8x128xf32>
    %245 = vector.extract_strided_slice %244 {offsets = [0, 0], sizes = [8, 32], strides = [1, 1]} : vector<8x128xf32> to vector<8x32xf32>
    %246 = arith.negf %245 : vector<8x32xf32>
    %247 = math.exp %246 : vector<8x32xf32>
    %cst_51 = arith.constant 1.000000e+00 : f32
    %248 = vector.broadcast %cst_51 : f32 to vector<8x32xf32>
    %249 = arith.addf %248, %247 : vector<8x32xf32>
    %250 = arith.divf %248, %249 : vector<8x32xf32>
    %251 = vector.extract_strided_slice %244 {offsets = [0, 32], sizes = [8, 32], strides = [1, 1]} : vector<8x128xf32> to vector<8x32xf32>
    %252 = arith.negf %251 : vector<8x32xf32>
    %253 = math.exp %252 : vector<8x32xf32>
    %cst_52 = arith.constant 1.000000e+00 : f32
    %254 = vector.broadcast %cst_52 : f32 to vector<8x32xf32>
    %255 = arith.addf %254, %253 : vector<8x32xf32>
    %256 = arith.divf %254, %255 : vector<8x32xf32>
    %257 = vector.extract_strided_slice %244 {offsets = [0, 64], sizes = [8, 32], strides = [1, 1]} : vector<8x128xf32> to vector<8x32xf32>
    %258 = math.tanh %257 : vector<8x32xf32>
    %259 = vector.extract_strided_slice %244 {offsets = [0, 96], sizes = [8, 32], strides = [1, 1]} : vector<8x128xf32> to vector<8x32xf32>
    %260 = arith.negf %259 : vector<8x32xf32>
    %261 = math.exp %260 : vector<8x32xf32>
    %cst_53 = arith.constant 1.000000e+00 : f32
    %262 = vector.broadcast %cst_53 : f32 to vector<8x32xf32>
    %263 = arith.addf %262, %261 : vector<8x32xf32>
    %264 = arith.divf %262, %263 : vector<8x32xf32>
    %265 = arith.mulf %256, %241 : vector<8x32xf32>
    %266 = arith.mulf %250, %258 : vector<8x32xf32>
    %267 = arith.addf %265, %266 : vector<8x32xf32>
    %268 = math.tanh %267 : vector<8x32xf32>
    %269 = arith.mulf %264, %268 : vector<8x32xf32>
    %270 = vector.extract_strided_slice %239 {offsets = [8, 0], sizes = [8, 128], strides = [1, 1]} : vector<64x128xf32> to vector<8x128xf32>
    %cst_54 = arith.constant dense<0.000000e+00> : vector<8x128xf32>
    %271 = tpu.matmul %269, %235, %cst_54 {dimension_numbers = #tpu.dot_dimension_numbers<[1], [0], [0], [1], [0, 0, 1, 1], [], []>} : vector<8x32xf32>, vector<32x128xf32>, vector<8x128xf32> -> vector<8x128xf32>
    %272 = arith.addf %270, %271 : vector<8x128xf32>
    %273 = vector.extract_strided_slice %272 {offsets = [0, 0], sizes = [8, 32], strides = [1, 1]} : vector<8x128xf32> to vector<8x32xf32>
    %274 = arith.negf %273 : vector<8x32xf32>
    %275 = math.exp %274 : vector<8x32xf32>
    %cst_55 = arith.constant 1.000000e+00 : f32
    %276 = vector.broadcast %cst_55 : f32 to vector<8x32xf32>
    %277 = arith.addf %276, %275 : vector<8x32xf32>
    %278 = arith.divf %276, %277 : vector<8x32xf32>
    %279 = vector.extract_strided_slice %272 {offsets = [0, 32], sizes = [8, 32], strides = [1, 1]} : vector<8x128xf32> to vector<8x32xf32>
    %280 = arith.negf %279 : vector<8x32xf32>
    %281 = math.exp %280 : vector<8x32xf32>
    %cst_56 = arith.constant 1.000000e+00 : f32
    %282 = vector.broadcast %cst_56 : f32 to vector<8x32xf32>
    %283 = arith.addf %282, %281 : vector<8x32xf32>
    %284 = arith.divf %282, %283 : vector<8x32xf32>
    %285 = vector.extract_strided_slice %272 {offsets = [0, 64], sizes = [8, 32], strides = [1, 1]} : vector<8x128xf32> to vector<8x32xf32>
    %286 = math.tanh %285 : vector<8x32xf32>
    %287 = vector.extract_strided_slice %272 {offsets = [0, 96], sizes = [8, 32], strides = [1, 1]} : vector<8x128xf32> to vector<8x32xf32>
    %288 = arith.negf %287 : vector<8x32xf32>
    %289 = math.exp %288 : vector<8x32xf32>
    %cst_57 = arith.constant 1.000000e+00 : f32
    %290 = vector.broadcast %cst_57 : f32 to vector<8x32xf32>
    %291 = arith.addf %290, %289 : vector<8x32xf32>
    %292 = arith.divf %290, %291 : vector<8x32xf32>
    %293 = arith.mulf %284, %267 : vector<8x32xf32>
    %294 = arith.mulf %278, %286 : vector<8x32xf32>
    %295 = arith.addf %293, %294 : vector<8x32xf32>
    %296 = math.tanh %295 : vector<8x32xf32>
    %297 = arith.mulf %292, %296 : vector<8x32xf32>
    %298 = vector.extract_strided_slice %239 {offsets = [16, 0], sizes = [8, 128], strides = [1, 1]} : vector<64x128xf32> to vector<8x128xf32>
    %cst_58 = arith.constant dense<0.000000e+00> : vector<8x128xf32>
    %299 = tpu.matmul %297, %235, %cst_58 {dimension_numbers = #tpu.dot_dimension_numbers<[1], [0], [0], [1], [0, 0, 1, 1], [], []>} : vector<8x32xf32>, vector<32x128xf32>, vector<8x128xf32> -> vector<8x128xf32>
    %300 = arith.addf %298, %299 : vector<8x128xf32>
    %301 = vector.extract_strided_slice %300 {offsets = [0, 0], sizes = [8, 32], strides = [1, 1]} : vector<8x128xf32> to vector<8x32xf32>
    %302 = arith.negf %301 : vector<8x32xf32>
    %303 = math.exp %302 : vector<8x32xf32>
    %cst_59 = arith.constant 1.000000e+00 : f32
    %304 = vector.broadcast %cst_59 : f32 to vector<8x32xf32>
    %305 = arith.addf %304, %303 : vector<8x32xf32>
    %306 = arith.divf %304, %305 : vector<8x32xf32>
    %307 = vector.extract_strided_slice %300 {offsets = [0, 32], sizes = [8, 32], strides = [1, 1]} : vector<8x128xf32> to vector<8x32xf32>
    %308 = arith.negf %307 : vector<8x32xf32>
    %309 = math.exp %308 : vector<8x32xf32>
    %cst_60 = arith.constant 1.000000e+00 : f32
    %310 = vector.broadcast %cst_60 : f32 to vector<8x32xf32>
    %311 = arith.addf %310, %309 : vector<8x32xf32>
    %312 = arith.divf %310, %311 : vector<8x32xf32>
    %313 = vector.extract_strided_slice %300 {offsets = [0, 64], sizes = [8, 32], strides = [1, 1]} : vector<8x128xf32> to vector<8x32xf32>
    %314 = math.tanh %313 : vector<8x32xf32>
    %315 = vector.extract_strided_slice %300 {offsets = [0, 96], sizes = [8, 32], strides = [1, 1]} : vector<8x128xf32> to vector<8x32xf32>
    %316 = arith.negf %315 : vector<8x32xf32>
    %317 = math.exp %316 : vector<8x32xf32>
    %cst_61 = arith.constant 1.000000e+00 : f32
    %318 = vector.broadcast %cst_61 : f32 to vector<8x32xf32>
    %319 = arith.addf %318, %317 : vector<8x32xf32>
    %320 = arith.divf %318, %319 : vector<8x32xf32>
    %321 = arith.mulf %312, %295 : vector<8x32xf32>
    %322 = arith.mulf %306, %314 : vector<8x32xf32>
    %323 = arith.addf %321, %322 : vector<8x32xf32>
    %324 = math.tanh %323 : vector<8x32xf32>
    %325 = arith.mulf %320, %324 : vector<8x32xf32>
    %326 = vector.extract_strided_slice %239 {offsets = [24, 0], sizes = [8, 128], strides = [1, 1]} : vector<64x128xf32> to vector<8x128xf32>
    %cst_62 = arith.constant dense<0.000000e+00> : vector<8x128xf32>
    %327 = tpu.matmul %325, %235, %cst_62 {dimension_numbers = #tpu.dot_dimension_numbers<[1], [0], [0], [1], [0, 0, 1, 1], [], []>} : vector<8x32xf32>, vector<32x128xf32>, vector<8x128xf32> -> vector<8x128xf32>
    %328 = arith.addf %326, %327 : vector<8x128xf32>
    %329 = vector.extract_strided_slice %328 {offsets = [0, 0], sizes = [8, 32], strides = [1, 1]} : vector<8x128xf32> to vector<8x32xf32>
    %330 = arith.negf %329 : vector<8x32xf32>
    %331 = math.exp %330 : vector<8x32xf32>
    %cst_63 = arith.constant 1.000000e+00 : f32
    %332 = vector.broadcast %cst_63 : f32 to vector<8x32xf32>
    %333 = arith.addf %332, %331 : vector<8x32xf32>
    %334 = arith.divf %332, %333 : vector<8x32xf32>
    %335 = vector.extract_strided_slice %328 {offsets = [0, 32], sizes = [8, 32], strides = [1, 1]} : vector<8x128xf32> to vector<8x32xf32>
    %336 = arith.negf %335 : vector<8x32xf32>
    %337 = math.exp %336 : vector<8x32xf32>
    %cst_64 = arith.constant 1.000000e+00 : f32
    %338 = vector.broadcast %cst_64 : f32 to vector<8x32xf32>
    %339 = arith.addf %338, %337 : vector<8x32xf32>
    %340 = arith.divf %338, %339 : vector<8x32xf32>
    %341 = vector.extract_strided_slice %328 {offsets = [0, 64], sizes = [8, 32], strides = [1, 1]} : vector<8x128xf32> to vector<8x32xf32>
    %342 = math.tanh %341 : vector<8x32xf32>
    %343 = vector.extract_strided_slice %328 {offsets = [0, 96], sizes = [8, 32], strides = [1, 1]} : vector<8x128xf32> to vector<8x32xf32>
    %344 = arith.negf %343 : vector<8x32xf32>
    %345 = math.exp %344 : vector<8x32xf32>
    %cst_65 = arith.constant 1.000000e+00 : f32
    %346 = vector.broadcast %cst_65 : f32 to vector<8x32xf32>
    %347 = arith.addf %346, %345 : vector<8x32xf32>
    %348 = arith.divf %346, %347 : vector<8x32xf32>
    %349 = arith.mulf %340, %323 : vector<8x32xf32>
    %350 = arith.mulf %334, %342 : vector<8x32xf32>
    %351 = arith.addf %349, %350 : vector<8x32xf32>
    %352 = math.tanh %351 : vector<8x32xf32>
    %353 = arith.mulf %348, %352 : vector<8x32xf32>
    %354 = vector.extract_strided_slice %239 {offsets = [32, 0], sizes = [8, 128], strides = [1, 1]} : vector<64x128xf32> to vector<8x128xf32>
    %cst_66 = arith.constant dense<0.000000e+00> : vector<8x128xf32>
    %355 = tpu.matmul %353, %235, %cst_66 {dimension_numbers = #tpu.dot_dimension_numbers<[1], [0], [0], [1], [0, 0, 1, 1], [], []>} : vector<8x32xf32>, vector<32x128xf32>, vector<8x128xf32> -> vector<8x128xf32>
    %356 = arith.addf %354, %355 : vector<8x128xf32>
    %357 = vector.extract_strided_slice %356 {offsets = [0, 0], sizes = [8, 32], strides = [1, 1]} : vector<8x128xf32> to vector<8x32xf32>
    %358 = arith.negf %357 : vector<8x32xf32>
    %359 = math.exp %358 : vector<8x32xf32>
    %cst_67 = arith.constant 1.000000e+00 : f32
    %360 = vector.broadcast %cst_67 : f32 to vector<8x32xf32>
    %361 = arith.addf %360, %359 : vector<8x32xf32>
    %362 = arith.divf %360, %361 : vector<8x32xf32>
    %363 = vector.extract_strided_slice %356 {offsets = [0, 32], sizes = [8, 32], strides = [1, 1]} : vector<8x128xf32> to vector<8x32xf32>
    %364 = arith.negf %363 : vector<8x32xf32>
    %365 = math.exp %364 : vector<8x32xf32>
    %cst_68 = arith.constant 1.000000e+00 : f32
    %366 = vector.broadcast %cst_68 : f32 to vector<8x32xf32>
    %367 = arith.addf %366, %365 : vector<8x32xf32>
    %368 = arith.divf %366, %367 : vector<8x32xf32>
    %369 = vector.extract_strided_slice %356 {offsets = [0, 64], sizes = [8, 32], strides = [1, 1]} : vector<8x128xf32> to vector<8x32xf32>
    %370 = math.tanh %369 : vector<8x32xf32>
    %371 = vector.extract_strided_slice %356 {offsets = [0, 96], sizes = [8, 32], strides = [1, 1]} : vector<8x128xf32> to vector<8x32xf32>
    %372 = arith.negf %371 : vector<8x32xf32>
    %373 = math.exp %372 : vector<8x32xf32>
    %cst_69 = arith.constant 1.000000e+00 : f32
    %374 = vector.broadcast %cst_69 : f32 to vector<8x32xf32>
    %375 = arith.addf %374, %373 : vector<8x32xf32>
    %376 = arith.divf %374, %375 : vector<8x32xf32>
    %377 = arith.mulf %368, %351 : vector<8x32xf32>
    %378 = arith.mulf %362, %370 : vector<8x32xf32>
    %379 = arith.addf %377, %378 : vector<8x32xf32>
    %380 = math.tanh %379 : vector<8x32xf32>
    %381 = arith.mulf %376, %380 : vector<8x32xf32>
    %382 = vector.extract_strided_slice %239 {offsets = [40, 0], sizes = [8, 128], strides = [1, 1]} : vector<64x128xf32> to vector<8x128xf32>
    %cst_70 = arith.constant dense<0.000000e+00> : vector<8x128xf32>
    %383 = tpu.matmul %381, %235, %cst_70 {dimension_numbers = #tpu.dot_dimension_numbers<[1], [0], [0], [1], [0, 0, 1, 1], [], []>} : vector<8x32xf32>, vector<32x128xf32>, vector<8x128xf32> -> vector<8x128xf32>
    %384 = arith.addf %382, %383 : vector<8x128xf32>
    %385 = vector.extract_strided_slice %384 {offsets = [0, 0], sizes = [8, 32], strides = [1, 1]} : vector<8x128xf32> to vector<8x32xf32>
    %386 = arith.negf %385 : vector<8x32xf32>
    %387 = math.exp %386 : vector<8x32xf32>
    %cst_71 = arith.constant 1.000000e+00 : f32
    %388 = vector.broadcast %cst_71 : f32 to vector<8x32xf32>
    %389 = arith.addf %388, %387 : vector<8x32xf32>
    %390 = arith.divf %388, %389 : vector<8x32xf32>
    %391 = vector.extract_strided_slice %384 {offsets = [0, 32], sizes = [8, 32], strides = [1, 1]} : vector<8x128xf32> to vector<8x32xf32>
    %392 = arith.negf %391 : vector<8x32xf32>
    %393 = math.exp %392 : vector<8x32xf32>
    %cst_72 = arith.constant 1.000000e+00 : f32
    %394 = vector.broadcast %cst_72 : f32 to vector<8x32xf32>
    %395 = arith.addf %394, %393 : vector<8x32xf32>
    %396 = arith.divf %394, %395 : vector<8x32xf32>
    %397 = vector.extract_strided_slice %384 {offsets = [0, 64], sizes = [8, 32], strides = [1, 1]} : vector<8x128xf32> to vector<8x32xf32>
    %398 = math.tanh %397 : vector<8x32xf32>
    %399 = vector.extract_strided_slice %384 {offsets = [0, 96], sizes = [8, 32], strides = [1, 1]} : vector<8x128xf32> to vector<8x32xf32>
    %400 = arith.negf %399 : vector<8x32xf32>
    %401 = math.exp %400 : vector<8x32xf32>
    %cst_73 = arith.constant 1.000000e+00 : f32
    %402 = vector.broadcast %cst_73 : f32 to vector<8x32xf32>
    %403 = arith.addf %402, %401 : vector<8x32xf32>
    %404 = arith.divf %402, %403 : vector<8x32xf32>
    %405 = arith.mulf %396, %379 : vector<8x32xf32>
    %406 = arith.mulf %390, %398 : vector<8x32xf32>
    %407 = arith.addf %405, %406 : vector<8x32xf32>
    %408 = math.tanh %407 : vector<8x32xf32>
    %409 = arith.mulf %404, %408 : vector<8x32xf32>
    %410 = vector.extract_strided_slice %239 {offsets = [48, 0], sizes = [8, 128], strides = [1, 1]} : vector<64x128xf32> to vector<8x128xf32>
    %cst_74 = arith.constant dense<0.000000e+00> : vector<8x128xf32>
    %411 = tpu.matmul %409, %235, %cst_74 {dimension_numbers = #tpu.dot_dimension_numbers<[1], [0], [0], [1], [0, 0, 1, 1], [], []>} : vector<8x32xf32>, vector<32x128xf32>, vector<8x128xf32> -> vector<8x128xf32>
    %412 = arith.addf %410, %411 : vector<8x128xf32>
    %413 = vector.extract_strided_slice %412 {offsets = [0, 0], sizes = [8, 32], strides = [1, 1]} : vector<8x128xf32> to vector<8x32xf32>
    %414 = arith.negf %413 : vector<8x32xf32>
    %415 = math.exp %414 : vector<8x32xf32>
    %cst_75 = arith.constant 1.000000e+00 : f32
    %416 = vector.broadcast %cst_75 : f32 to vector<8x32xf32>
    %417 = arith.addf %416, %415 : vector<8x32xf32>
    %418 = arith.divf %416, %417 : vector<8x32xf32>
    %419 = vector.extract_strided_slice %412 {offsets = [0, 32], sizes = [8, 32], strides = [1, 1]} : vector<8x128xf32> to vector<8x32xf32>
    %420 = arith.negf %419 : vector<8x32xf32>
    %421 = math.exp %420 : vector<8x32xf32>
    %cst_76 = arith.constant 1.000000e+00 : f32
    %422 = vector.broadcast %cst_76 : f32 to vector<8x32xf32>
    %423 = arith.addf %422, %421 : vector<8x32xf32>
    %424 = arith.divf %422, %423 : vector<8x32xf32>
    %425 = vector.extract_strided_slice %412 {offsets = [0, 64], sizes = [8, 32], strides = [1, 1]} : vector<8x128xf32> to vector<8x32xf32>
    %426 = math.tanh %425 : vector<8x32xf32>
    %427 = vector.extract_strided_slice %412 {offsets = [0, 96], sizes = [8, 32], strides = [1, 1]} : vector<8x128xf32> to vector<8x32xf32>
    %428 = arith.negf %427 : vector<8x32xf32>
    %429 = math.exp %428 : vector<8x32xf32>
    %cst_77 = arith.constant 1.000000e+00 : f32
    %430 = vector.broadcast %cst_77 : f32 to vector<8x32xf32>
    %431 = arith.addf %430, %429 : vector<8x32xf32>
    %432 = arith.divf %430, %431 : vector<8x32xf32>
    %433 = arith.mulf %424, %407 : vector<8x32xf32>
    %434 = arith.mulf %418, %426 : vector<8x32xf32>
    %435 = arith.addf %433, %434 : vector<8x32xf32>
    %436 = math.tanh %435 : vector<8x32xf32>
    %437 = arith.mulf %432, %436 : vector<8x32xf32>
    %438 = vector.extract_strided_slice %239 {offsets = [56, 0], sizes = [8, 128], strides = [1, 1]} : vector<64x128xf32> to vector<8x128xf32>
    %cst_78 = arith.constant dense<0.000000e+00> : vector<8x128xf32>
    %439 = tpu.matmul %437, %235, %cst_78 {dimension_numbers = #tpu.dot_dimension_numbers<[1], [0], [0], [1], [0, 0, 1, 1], [], []>} : vector<8x32xf32>, vector<32x128xf32>, vector<8x128xf32> -> vector<8x128xf32>
    %440 = arith.addf %438, %439 : vector<8x128xf32>
    %441 = vector.extract_strided_slice %440 {offsets = [0, 0], sizes = [8, 32], strides = [1, 1]} : vector<8x128xf32> to vector<8x32xf32>
    %442 = arith.negf %441 : vector<8x32xf32>
    %443 = math.exp %442 : vector<8x32xf32>
    %cst_79 = arith.constant 1.000000e+00 : f32
    %444 = vector.broadcast %cst_79 : f32 to vector<8x32xf32>
    %445 = arith.addf %444, %443 : vector<8x32xf32>
    %446 = arith.divf %444, %445 : vector<8x32xf32>
    %447 = vector.extract_strided_slice %440 {offsets = [0, 32], sizes = [8, 32], strides = [1, 1]} : vector<8x128xf32> to vector<8x32xf32>
    %448 = arith.negf %447 : vector<8x32xf32>
    %449 = math.exp %448 : vector<8x32xf32>
    %cst_80 = arith.constant 1.000000e+00 : f32
    %450 = vector.broadcast %cst_80 : f32 to vector<8x32xf32>
    %451 = arith.addf %450, %449 : vector<8x32xf32>
    %452 = arith.divf %450, %451 : vector<8x32xf32>
    %453 = vector.extract_strided_slice %440 {offsets = [0, 64], sizes = [8, 32], strides = [1, 1]} : vector<8x128xf32> to vector<8x32xf32>
    %454 = math.tanh %453 : vector<8x32xf32>
    %455 = vector.extract_strided_slice %440 {offsets = [0, 96], sizes = [8, 32], strides = [1, 1]} : vector<8x128xf32> to vector<8x32xf32>
    %456 = arith.negf %455 : vector<8x32xf32>
    %457 = math.exp %456 : vector<8x32xf32>
    %cst_81 = arith.constant 1.000000e+00 : f32
    %458 = vector.broadcast %cst_81 : f32 to vector<8x32xf32>
    %459 = arith.addf %458, %457 : vector<8x32xf32>
    %460 = arith.divf %458, %459 : vector<8x32xf32>
    %461 = arith.mulf %452, %435 : vector<8x32xf32>
    %462 = arith.mulf %446, %454 : vector<8x32xf32>
    %463 = arith.addf %461, %462 : vector<8x32xf32>
    %464 = math.tanh %463 : vector<8x32xf32>
    %465 = arith.mulf %460, %464 : vector<8x32xf32>
    %c0_82 = arith.constant 0 : index
    %c0_83 = arith.constant 0 : index
    %466 = vector.load %arg9[%c0_82, %c0_83] : memref<8x1xf32, #tpu.memory_space<vmem>>, vector<8x1xf32>
    %467 = vector.broadcast %466 : vector<8x1xf32> to vector<8x32xf32>
    %468 = arith.mulf %465, %467 : vector<8x32xf32>
    %c0_84 = arith.constant 0 : index
    %c0_85 = arith.constant 0 : index
    %469 = vector.load %arg7[%c0_84, %c0_85] : memref<32x10xf32, #tpu.memory_space<vmem>>, vector<32x10xf32>
    %cst_86 = arith.constant dense<0.000000e+00> : vector<8x10xf32>
    %470 = tpu.matmul %468, %469, %cst_86 {dimension_numbers = #tpu.dot_dimension_numbers<[1], [0], [0], [1], [0, 0, 1, 1], [], []>} : vector<8x32xf32>, vector<32x10xf32>, vector<8x10xf32> -> vector<8x10xf32>
    %c0_87 = arith.constant 0 : index
    %c0_88 = arith.constant 0 : index
    %471 = vector.load %arg8[%c0_87, %c0_88] : memref<1x10xf32, #tpu.memory_space<vmem>>, vector<1x10xf32>
    %472 = vector.broadcast %471 : vector<1x10xf32> to vector<8x10xf32>
    %473 = arith.addf %470, %472 : vector<8x10xf32>
    %c0_89 = arith.constant 0 : index
    %c0_90 = arith.constant 0 : index
    %474 = vector.load %arg10[%c0_89, %c0_90] : memref<8x10xf32, #tpu.memory_space<vmem>>, vector<8x10xf32>
    tpu.vector_store %arg10[%c0_89, %c0_90], %473 {strides = array<i32>} : memref<8x10xf32, #tpu.memory_space<vmem>>, vector<8x10xf32>,
    return
  }
}

</mosaic_0001>

<llo_original>
// kernel: tpu_custom_call.1
$region0: #{tpu_custom_call.1}
  #allocation0 [shape = 'u32[]', space=smem, size = 0x4, offset = 0x4, fixed_abs, tag = 'smem constant byte address 0x4 - core index']
  #allocation1 [shape = 'u32[144,128]{1,0:T(1,128)}', space=vmem, size = 0x12000, scoped, tag = 'internal scratch']
  %s0 = inlined_call_operand.vmem [shape: f32[64,16], index: 0, kind: input, shape index: {}]
  %s1 = inlined_call_operand.vmem [shape: f32[16,128], index: 1, kind: input, shape index: {}]
  %s2 = inlined_call_operand.vmem [shape: f32[32,128], index: 2, kind: input, shape index: {}]
  %s3 = inlined_call_operand.vmem [shape: f32[1,128], index: 3, kind: input, shape index: {}]
  %s4 = inlined_call_operand.vmem [shape: f32[32,128], index: 4, kind: input, shape index: {}]
  %s5 = inlined_call_operand.vmem [shape: f32[32,128], index: 5, kind: input, shape index: {}]
  %s6 = inlined_call_operand.vmem [shape: f32[1,128], index: 6, kind: input, shape index: {}]
  %s7 = inlined_call_operand.vmem [shape: f32[32,10], index: 7, kind: input, shape index: {}]
  %s8 = inlined_call_operand.vmem [shape: f32[1,10], index: 8, kind: input, shape index: {}]
  %s9 = inlined_call_operand.vmem [shape: f32[8,1], index: 9, kind: input, shape index: {}]
  %s10 = inlined_call_operand.hbm [shape: f32[8,10], index: 10, kind: output, shape index: {}]
  %s11 = sld [smem:[#allocation0]]
  $region50: #{tpu_custom_call.1} parent=0
    _
  %s13 = ssub.s32 1, %s11
  %s14 = scalar_select 0, %s13, %s11
  $region1: #{tpu_custom_call.1} parent=0
    #allocation2 [shape = 'u8[4096]{0}', space=vmem, size = 0x1000, scoped, tag = 'output window, operand 0, single buffered']
    #allocation3 [shape = 's32[1]{0}', space=sflag, size = 0x4, scoped, tag = 'scoped memory for tpu_custom_call.1']
    %15 = vsyncpa [#allocation3], 0
    // Predicated region
    $region2: #{tpu_custom_call.1} parent=1 // pred_check
      _
    $region3: #{tpu_custom_call.1} parent=1 // pred_check_branch
      %17 = sbr.rel (0) target = $region5
    $region4: #{tpu_custom_call.1} parent=1 // pred_region
      _
    $region5: #{tpu_custom_call.1} parent=1 // pred_fallthru
      _
    // Predicated region
    $region6: #{tpu_custom_call.1} parent=1 // pred_check
      _
    $region7: #{tpu_custom_call.1} parent=1 // pred_check_branch
      %19 = sbr.rel (0) target = $region9
    $region8: #{tpu_custom_call.1} parent=1 // pred_region
      _
    $region9: #{tpu_custom_call.1} parent=1 // pred_fallthru
      _
    // Predicated region
    $region10: #{tpu_custom_call.1} parent=1 // pred_check
      _
    $region11: #{tpu_custom_call.1} parent=1 // pred_check_branch
      %21 = sbr.rel (0) target = $region13
    $region12: #{tpu_custom_call.1} parent=1 // pred_region
      _
    $region13: #{tpu_custom_call.1} parent=1 // pred_fallthru
      _
    // Predicated region
    $region14: #{tpu_custom_call.1} parent=1 // pred_check
      _
    $region15: #{tpu_custom_call.1} parent=1 // pred_check_branch
      %23 = sbr.rel (0) target = $region17
    $region16: #{tpu_custom_call.1} parent=1 // pred_region
      _
    $region17: #{tpu_custom_call.1} parent=1 // pred_fallthru
      _
    // Predicated region
    $region18: #{tpu_custom_call.1} parent=1 // pred_check
      _
    $region19: #{tpu_custom_call.1} parent=1 // pred_check_branch
      %25 = sbr.rel (0) target = $region21
    $region20: #{tpu_custom_call.1} parent=1 // pred_region
      _
    $region21: #{tpu_custom_call.1} parent=1 // pred_fallthru
      _
    // Predicated region
    $region22: #{tpu_custom_call.1} parent=1 // pred_check
      _
    $region23: #{tpu_custom_call.1} parent=1 // pred_check_branch
      %27 = sbr.rel (0) target = $region25
    $region24: #{tpu_custom_call.1} parent=1 // pred_region
      _
    $region25: #{tpu_custom_call.1} parent=1 // pred_fallthru
      _
    // Predicated region
    $region26: #{tpu_custom_call.1} parent=1 // pred_check
      _
    $region27: #{tpu_custom_call.1} parent=1 // pred_check_branch
      %29 = sbr.rel (0) target = $region29
    $region28: #{tpu_custom_call.1} parent=1 // pred_region
      _
    $region29: #{tpu_custom_call.1} parent=1 // pred_fallthru
      _
    // Predicated region
    $region30: #{tpu_custom_call.1} parent=1 // pred_check
      _
    $region31: #{tpu_custom_call.1} parent=1 // pred_check_branch
      %31 = sbr.rel (0) target = $region33
    $region32: #{tpu_custom_call.1} parent=1 // pred_region
      _
    $region33: #{tpu_custom_call.1} parent=1 // pred_fallthru
      _
    // Predicated region
    $region34: #{tpu_custom_call.1} parent=1 // pred_check
      _
    $region35: #{tpu_custom_call.1} parent=1 // pred_check_branch
      %33 = sbr.rel (0) target = $region37
    $region36: #{tpu_custom_call.1} parent=1 // pred_region
      _
    $region37: #{tpu_custom_call.1} parent=1 // pred_fallthru
      _
    // Predicated region
    $region38: #{tpu_custom_call.1} parent=1 // pred_check
      _
    $region39: #{tpu_custom_call.1} parent=1 // pred_check_branch
      %35 = sbr.rel (0) target = $region41
    $region40: #{tpu_custom_call.1} parent=1 // pred_region
      _
    $region41: #{tpu_custom_call.1} parent=1 // pred_fallthru
      _
    %v36 = vld [vmem:[%s0] sm:$0xff]
    %v37 = vld [vmem:[%s0 + $0x8] sm:$0xff]
    %v38 = vld [vmem:[%s0 + $0x10] sm:$0xff]
    %v39 = vld [vmem:[%s0 + $0x18] sm:$0xff]
    %v40 = vld [vmem:[%s0 + $0x20] sm:$0xff]
    %v41 = vld [vmem:[%s0 + $0x28] sm:$0xff]
    %v42 = vld [vmem:[%s0 + $0x30] sm:$0xff]
    %v43 = vld [vmem:[%s0 + $0x38] sm:$0xff]
    %v44 = vld [vmem:[%s1] sm:$0xff]
    %v45 = vld [vmem:[%s1 + $0x8] sm:$0xff]
    %v46 = vld [vmem:[%s2] sm:$0xff]
    %v47 = vld [vmem:[%s2 + $0x8] sm:$0xff]
    %v48 = vld [vmem:[%s2 + $0x10] sm:$0xff]
    %v49 = vld [vmem:[%s2 + $0x18] sm:$0xff]
    %v50 = vld [vmem:[%s3] sm:$0x1]
    %v52 = vlaneseq
    %v53 = vshrl.u32 %v52, 7
    %v54 = vsub.s32 0, %v53
    %v55 = vrot.slane %v50, %v54
    %vm57 = vcmask 130048
    %v59 = vsel %vm57, %v36, 0
    %v62 = vsel %vm57, %v37, 0
    %v65 = vsel %vm57, %v38, 0
    %v68 = vsel %vm57, %v39, 0
    %v71 = vsel %vm57, %v40, 0
    %v74 = vsel %vm57, %v41, 0
    %v77 = vsel %vm57, %v42, 0
    %v80 = vsel %vm57, %v43, 0
    %82 = vmatprep.subr.mxu0 0.0
    %83 = vmatpush1.msra.mxu0 %v44
    %84 = vmatprep.subr.mxu0 0.0
    %85 = vmatpush1.msra.mxu0 %v45
    %86 = vmatprep.subr.mxu0 0.0
    %87 = vmatpush1.msra.mxu0 0.0
    %88 = vmatprep.subr.mxu0 0.0
    %89 = vmatpush1.msra.mxu0 0.0
    %90 = vmatprep.subr.mxu0 0.0
    %91 = vmatpush1.msra.mxu0 0.0
    %92 = vmatprep.subr.mxu0 0.0
    %93 = vmatpush1.msra.mxu0 0.0
    %94 = vmatprep.subr.mxu0 0.0
    %95 = vmatpush1.msra.mxu0 0.0
    %96 = vmatprep.subr.mxu0 0.0
    %97 = vmatpush1.msra.mxu0 0.0
    %98 = vmatprep.subr.mxu0 0.0
    %99 = vmatpush1.msra.mxu0 0.0
    %100 = vmatprep.subr.mxu0 0.0
    %101 = vmatpush1.msra.mxu0 0.0
    %102 = vmatprep.subr.mxu0 0.0
    %103 = vmatpush1.msra.mxu0 0.0
    %104 = vmatprep.subr.mxu0 0.0
    %105 = vmatpush1.msra.mxu0 0.0
    %106 = vmatprep.subr.mxu0 0.0
    %107 = vmatpush1.msra.mxu0 0.0
    %108 = vmatprep.subr.mxu0 0.0
    %109 = vmatpush1.msra.mxu0 0.0
    %110 = vmatprep.subr.mxu0 0.0
    %111 = vmatpush1.msra.mxu0 0.0
    %112 = vmatprep.subr.mxu0 0.0
    %113 = vmatpush1.msra.mxu0 0.0
    %114 = vmatprep.subr.mxu0 0.0
    %115 = vmatpush1.msra.mxu0 0.0
    %116 = vmatprep.subr.mxu0 0.0
    %117 = vmatpush1.msra.mxu0 0.0
    %118 = vmatprep.subr.mxu0 0.0
    %119 = vmatpush1.msra.mxu0 0.0
    %120 = vmatprep.subr.mxu0 0.0
    %121 = vmatpush1.msra.mxu0 0.0
    %122 = vmatprep.subr.mxu0 0.0
    %123 = vmatpush1.msra.mxu0 0.0
    %124 = vmatprep.subr.mxu0 0.0
    %125 = vmatpush1.msra.mxu0 0.0
    %126 = vmatprep.subr.mxu0 0.0
    %127 = vmatpush1.msra.mxu0 0.0
    %128 = vmatprep.subr.mxu0 0.0
    %129 = vmatpush1.msra.mxu0 0.0
    %130 = vmatprep.subr.mxu0 0.0
    %131 = vmatpush1.msra.mxu0 0.0
    %132 = vmatprep.subr.mxu0 0.0
    %133 = vmatpush1.msra.mxu0 0.0
    %134 = vmatprep.subr.mxu0 0.0
    %135 = vmatpush1.msra.mxu0 0.0
    %136 = vmatprep.subr.mxu0 0.0
    %137 = vmatpush1.msra.mxu0 0.0
    %138 = vmatprep.subr.mxu0 0.0
    %139 = vmatpush1.msra.mxu0 0.0
    %140 = vmatprep.subr.mxu0 0.0
    %141 = vmatpush1.msra.mxu0 0.0
    %142 = vmatprep.subr.mxu0 0.0
    %143 = vmatpush1.msra.mxu0 0.0
    %144 = vmatprep.subr.mxu0 0.0
    %145 = vmatpush1.msra.mxu0 0.0
    %146 = vmatprep.mubr.f32.mxu0 0.0
    %147 = vmatmul.mubr.f32.gmra.mrb[0].mxu0 %v59
    %v148 = vpop.f32.mrb[0].mxu0
    %v149 = vadd.f32 %v55, %v148
    %v150 = vpop.f32.mrb[0].mxu0
    %151 = vmatprep.mubr.f32.mxu0 0.0
    %152 = vmatmul.mubr.f32.gmra.mrb[0].mxu0 %v62
    %v153 = vpop.f32.mrb[0].mxu0
    %v154 = vadd.f32 %v55, %v153
    %v155 = vpop.f32.mrb[0].mxu0
    %156 = vmatprep.mubr.f32.mxu0 0.0
    %157 = vmatmul.mubr.f32.gmra.mrb[0].mxu0 %v65
    %v158 = vpop.f32.mrb[0].mxu0
    %v159 = vadd.f32 %v55, %v158
    %v160 = vpop.f32.mrb[0].mxu0
    %161 = vmatprep.mubr.f32.mxu0 0.0
    %162 = vmatmul.mubr.f32.gmra.mrb[0].mxu0 %v68
    %v163 = vpop.f32.mrb[0].mxu0
    %v164 = vadd.f32 %v55, %v163
    %v165 = vpop.f32.mrb[0].mxu0
    %166 = vmatprep.mubr.f32.mxu0 0.0
    %167 = vmatmul.mubr.f32.gmra.mrb[0].mxu0 %v71
    %v168 = vpop.f32.mrb[0].mxu0
    %v169 = vadd.f32 %v55, %v168
    %v170 = vpop.f32.mrb[0].mxu0
    %171 = vmatprep.mubr.f32.mxu0 0.0
    %172 = vmatmul.mubr.f32.gmra.mrb[0].mxu0 %v74
    %v173 = vpop.f32.mrb[0].mxu0
    %v174 = vadd.f32 %v55, %v173
    %v175 = vpop.f32.mrb[0].mxu0
    %176 = vmatprep.mubr.f32.mxu0 0.0
    %177 = vmatmul.mubr.f32.gmra.mrb[0].mxu0 %v77
    %v178 = vpop.f32.mrb[0].mxu0
    %v179 = vadd.f32 %v55, %v178
    %v180 = vpop.f32.mrb[0].mxu0
    %181 = vmatprep.mubr.f32.mxu0 0.0
    %182 = vmatmul.mubr.f32.gmra.mrb[0].mxu0 %v80
    %v183 = vpop.f32.mrb[0].mxu0
    %v184 = vadd.f32 %v55, %v183
    %v185 = vpop.f32.mrb[0].mxu0
    %186 = vdwg.mxu0
    %vm187 = vcmask 261120
    %v189 = vsel %vm187, 0.0, 0
    %191 = vmatprep.subr.mxu0 0.0
    %192 = vmatpush1.msra.mxu0 %v46
    %193 = vmatprep.subr.mxu0 0.0
    %194 = vmatpush1.msra.mxu0 %v47
    %195 = vmatprep.subr.mxu0 0.0
    %196 = vmatpush1.msra.mxu0 %v48
    %197 = vmatprep.subr.mxu0 0.0
    %198 = vmatpush1.msra.mxu0 %v49
    %199 = vmatprep.subr.mxu0 0.0
    %200 = vmatpush1.msra.mxu0 0.0
    %201 = vmatprep.subr.mxu0 0.0
    %202 = vmatpush1.msra.mxu0 0.0
    %203 = vmatprep.subr.mxu0 0.0
    %204 = vmatpush1.msra.mxu0 0.0
    %205 = vmatprep.subr.mxu0 0.0
    %206 = vmatpush1.msra.mxu0 0.0
    %207 = vmatprep.subr.mxu0 0.0
    %208 = vmatpush1.msra.mxu0 0.0
    %209 = vmatprep.subr.mxu0 0.0
    %210 = vmatpush1.msra.mxu0 0.0
    %211 = vmatprep.subr.mxu0 0.0
    %212 = vmatpush1.msra.mxu0 0.0
    %213 = vmatprep.subr.mxu0 0.0
    %214 = vmatpush1.msra.mxu0 0.0
    %215 = vmatprep.subr.mxu0 0.0
    %216 = vmatpush1.msra.mxu0 0.0
    %217 = vmatprep.subr.mxu0 0.0
    %218 = vmatpush1.msra.mxu0 0.0
    %219 = vmatprep.subr.mxu0 0.0
    %220 = vmatpush1.msra.mxu0 0.0
    %221 = vmatprep.subr.mxu0 0.0
    %222 = vmatpush1.msra.mxu0 0.0
    %223 = vmatprep.subr.mxu0 0.0
    %224 = vmatpush1.msra.mxu0 0.0
    %225 = vmatprep.subr.mxu0 0.0
    %226 = vmatpush1.msra.mxu0 0.0
    %227 = vmatprep.subr.mxu0 0.0
    %228 = vmatpush1.msra.mxu0 0.0
    %229 = vmatprep.subr.mxu0 0.0
    %230 = vmatpush1.msra.mxu0 0.0
    %231 = vmatprep.subr.mxu0 0.0
    %232 = vmatpush1.msra.mxu0 0.0
    %233 = vmatprep.subr.mxu0 0.0
    %234 = vmatpush1.msra.mxu0 0.0
    %235 = vmatprep.subr.mxu0 0.0
    %236 = vmatpush1.msra.mxu0 0.0
    %237 = vmatprep.subr.mxu0 0.0
    %238 = vmatpush1.msra.mxu0 0.0
    %239 = vmatprep.subr.mxu0 0.0
    %240 = vmatpush1.msra.mxu0 0.0
    %241 = vmatprep.subr.mxu0 0.0
    %242 = vmatpush1.msra.mxu0 0.0
    %243 = vmatprep.subr.mxu0 0.0
    %244 = vmatpush1.msra.mxu0 0.0
    %245 = vmatprep.subr.mxu0 0.0
    %246 = vmatpush1.msra.mxu0 0.0
    %247 = vmatprep.subr.mxu0 0.0
    %248 = vmatpush1.msra.mxu0 0.0
    %249 = vmatprep.subr.mxu0 0.0
    %250 = vmatpush1.msra.mxu0 0.0
    %251 = vmatprep.subr.mxu0 0.0
    %252 = vmatpush1.msra.mxu0 0.0
    %253 = vmatprep.subr.mxu0 0.0
    %254 = vmatpush1.msra.mxu0 0.0
    %255 = vmatprep.mubr.f32.mxu0 0.0
    %256 = vmatmul.mubr.f32.gmra.mrb[0].mxu0 %v189
    %v257 = vpop.f32.mrb[0].mxu0
    %v258 = vadd.f32 0.0, %v257
    %v259 = vpop.f32.mrb[0].mxu0
    %260 = vdwg.mxu0
    %v261 = vadd.f32 %v149, %v258
    %v262 = vxor.u32 %v261, 2147483648
    %v263 = vmul.f32 %v262, 1.442695
    %v264 = vpow.pop %v263
    %v265 = vadd.f32 %v264, 1.0
    %v266 = vrcp.pop %v265
    %v267 = vmul.f32 1.0, %v266
    %v268 = vtanh.pop %v261
    %v269 = vmul.f32 %v267, 0.0
    %271 = vrot.lane.b32.xlu0 %v268, 64
    %v272 = vpop.permute.xlu0 %271
    %v274 = vmul.f32 %v267, %v272
    %276 = vrot.lane.b32.xlu0 %v274, 32
    %v277 = vpop.permute.xlu0 %276
    %v279 = vadd.f32 %v269, %v277
    %v280 = vtanh.pop %v279
    %282 = vrot.lane.b32.xlu0 %v280, 64
    %v283 = vpop.permute.xlu0 %282
    %v285 = vmul.f32 %v267, %v283
    %287 = vrot.lane.b32.xlu0 %v285, 32
    %v288 = vpop.permute.xlu0 %287
    %v289 = vsel %vm187, %v288, 0
    %291 = vmatprep.subr.mxu0 0.0
    %292 = vmatpush1.msra.mxu0 %v46
    %293 = vmatprep.subr.mxu0 0.0
    %294 = vmatpush1.msra.mxu0 %v47
    %295 = vmatprep.subr.mxu0 0.0
    %296 = vmatpush1.msra.mxu0 %v48
    %297 = vmatprep.subr.mxu0 0.0
    %298 = vmatpush1.msra.mxu0 %v49
    %299 = vmatprep.subr.mxu0 0.0
    %300 = vmatpush1.msra.mxu0 0.0
    %301 = vmatprep.subr.mxu0 0.0
    %302 = vmatpush1.msra.mxu0 0.0
    %303 = vmatprep.subr.mxu0 0.0
    %304 = vmatpush1.msra.mxu0 0.0
    %305 = vmatprep.subr.mxu0 0.0
    %306 = vmatpush1.msra.mxu0 0.0
    %307 = vmatprep.subr.mxu0 0.0
    %308 = vmatpush1.msra.mxu0 0.0
    %309 = vmatprep.subr.mxu0 0.0
    %310 = vmatpush1.msra.mxu0 0.0
    %311 = vmatprep.subr.mxu0 0.0
    %312 = vmatpush1.msra.mxu0 0.0
    %313 = vmatprep.subr.mxu0 0.0
    %314 = vmatpush1.msra.mxu0 0.0
    %315 = vmatprep.subr.mxu0 0.0
    %316 = vmatpush1.msra.mxu0 0.0
    %317 = vmatprep.subr.mxu0 0.0
    %318 = vmatpush1.msra.mxu0 0.0
    %319 = vmatprep.subr.mxu0 0.0
    %320 = vmatpush1.msra.mxu0 0.0
    %321 = vmatprep.subr.mxu0 0.0
    %322 = vmatpush1.msra.mxu0 0.0
    %323 = vmatprep.subr.mxu0 0.0
    %324 = vmatpush1.msra.mxu0 0.0
    %325 = vmatprep.subr.mxu0 0.0
    %326 = vmatpush1.msra.mxu0 0.0
    %327 = vmatprep.subr.mxu0 0.0
    %328 = vmatpush1.msra.mxu0 0.0
    %329 = vmatprep.subr.mxu0 0.0
    %330 = vmatpush1.msra.mxu0 0.0
    %331 = vmatprep.subr.mxu0 0.0
    %332 = vmatpush1.msra.mxu0 0.0
    %333 = vmatprep.subr.mxu0 0.0
    %334 = vmatpush1.msra.mxu0 0.0
    %335 = vmatprep.subr.mxu0 0.0
    %336 = vmatpush1.msra.mxu0 0.0
    %337 = vmatprep.subr.mxu0 0.0
    %338 = vmatpush1.msra.mxu0 0.0
    %339 = vmatprep.subr.mxu0 0.0
    %340 = vmatpush1.msra.mxu0 0.0
    %341 = vmatprep.subr.mxu0 0.0
    %342 = vmatpush1.msra.mxu0 0.0
    %343 = vmatprep.subr.mxu0 0.0
    %344 = vmatpush1.msra.mxu0 0.0
    %345 = vmatprep.subr.mxu0 0.0
    %346 = vmatpush1.msra.mxu0 0.0
    %347 = vmatprep.subr.mxu0 0.0
    %348 = vmatpush1.msra.mxu0 0.0
    %349 = vmatprep.subr.mxu0 0.0
    %350 = vmatpush1.msra.mxu0 0.0
    %351 = vmatprep.subr.mxu0 0.0
    %352 = vmatpush1.msra.mxu0 0.0
    %353 = vmatprep.subr.mxu0 0.0
    %354 = vmatpush1.msra.mxu0 0.0
    %355 = vmatprep.mubr.f32.mxu0 0.0
    %356 = vmatmul.mubr.f32.gmra.mrb[0].mxu0 %v289
    %v357 = vpop.f32.mrb[0].mxu0
    %v358 = vadd.f32 0.0, %v357
    %v359 = vpop.f32.mrb[0].mxu0
    %360 = vdwg.mxu0
    %v361 = vadd.f32 %v154, %v358
    %v362 = vxor.u32 %v361, 2147483648
    %v363 = vmul.f32 %v362, 1.442695
    %v364 = vpow.pop %v363
    %v365 = vadd.f32 %v364, 1.0
    %v366 = vrcp.pop %v365
    %v367 = vmul.f32 1.0, %v366
    %v368 = vtanh.pop %v361
    %v369 = vmul.f32 %v367, %v279
    %371 = vrot.lane.b32.xlu0 %v368, 64
    %v372 = vpop.permute.xlu0 %371
    %v374 = vmul.f32 %v367, %v372
    %376 = vrot.lane.b32.xlu0 %v374, 32
    %v377 = vpop.permute.xlu0 %376
    %v379 = vadd.f32 %v369, %v377
    %v380 = vtanh.pop %v379
    %382 = vrot.lane.b32.xlu0 %v380, 64
    %v383 = vpop.permute.xlu0 %382
    %v385 = vmul.f32 %v367, %v383
    %387 = vrot.lane.b32.xlu0 %v385, 32
    %v388 = vpop.permute.xlu0 %387
    %v389 = vsel %vm187, %v388, 0
    %391 = vmatprep.subr.mxu0 0.0
    %392 = vmatpush1.msra.mxu0 %v46
    %393 = vmatprep.subr.mxu0 0.0
    %394 = vmatpush1.msra.mxu0 %v47
    %395 = vmatprep.subr.mxu0 0.0
    %396 = vmatpush1.msra.mxu0 %v48
    %397 = vmatprep.subr.mxu0 0.0
    %398 = vmatpush1.msra.mxu0 %v49
    %399 = vmatprep.subr.mxu0 0.0
    %400 = vmatpush1.msra.mxu0 0.0
    %401 = vmatprep.subr.mxu0 0.0
    %402 = vmatpush1.msra.mxu0 0.0
    %403 = vmatprep.subr.mxu0 0.0
    %404 = vmatpush1.msra.mxu0 0.0
    %405 = vmatprep.subr.mxu0 0.0
    %406 = vmatpush1.msra.mxu0 0.0
    %407 = vmatprep.subr.mxu0 0.0
    %408 = vmatpush1.msra.mxu0 0.0
    %409 = vmatprep.subr.mxu0 0.0
    %410 = vmatpush1.msra.mxu0 0.0
    %411 = vmatprep.subr.mxu0 0.0
    %412 = vmatpush1.msra.mxu0 0.0
    %413 = vmatprep.subr.mxu0 0.0
    %414 = vmatpush1.msra.mxu0 0.0
    %415 = vmatprep.subr.mxu0 0.0
    %416 = vmatpush1.msra.mxu0 0.0
    %417 = vmatprep.subr.mxu0 0.0
    %418 = vmatpush1.msra.mxu0 0.0
    %419 = vmatprep.subr.mxu0 0.0
    %420 = vmatpush1.msra.mxu0 0.0
    %421 = vmatprep.subr.mxu0 0.0
    %422 = vmatpush1.msra.mxu0 0.0
    %423 = vmatprep.subr.mxu0 0.0
    %424 = vmatpush1.msra.mxu0 0.0
    %425 = vmatprep.subr.mxu0 0.0
    %426 = vmatpush1.msra.mxu0 0.0
    %427 = vmatprep.subr.mxu0 0.0
    %428 = vmatpush1.msra.mxu0 0.0
    %429 = vmatprep.subr.mxu0 0.0
    %430 = vmatpush1.msra.mxu0 0.0
    %431 = vmatprep.subr.mxu0 0.0
    %432 = vmatpush1.msra.mxu0 0.0
    %433 = vmatprep.subr.mxu0 0.0
    %434 = vmatpush1.msra.mxu0 0.0
    %435 = vmatprep.subr.mxu0 0.0
    %436 = vmatpush1.msra.mxu0 0.0
    %437 = vmatprep.subr.mxu0 0.0
    %438 = vmatpush1.msra.mxu0 0.0
    %439 = vmatprep.subr.mxu0 0.0
    %440 = vmatpush1.msra.mxu0 0.0
    %441 = vmatprep.subr.mxu0 0.0
    %442 = vmatpush1.msra.mxu0 0.0
    %443 = vmatprep.subr.mxu0 0.0
    %444 = vmatpush1.msra.mxu0 0.0
    %445 = vmatprep.subr.mxu0 0.0
    %446 = vmatpush1.msra.mxu0 0.0
    %447 = vmatprep.subr.mxu0 0.0
    %448 = vmatpush1.msra.mxu0 0.0
    %449 = vmatprep.subr.mxu0 0.0
    %450 = vmatpush1.msra.mxu0 0.0
    %451 = vmatprep.subr.mxu0 0.0
    %452 = vmatpush1.msra.mxu0 0.0
    %453 = vmatprep.subr.mxu0 0.0
    %454 = vmatpush1.msra.mxu0 0.0
    %455 = vmatprep.mubr.f32.mxu0 0.0
    %456 = vmatmul.mubr.f32.gmra.mrb[0].mxu0 %v389
    %v457 = vpop.f32.mrb[0].mxu0
    %v458 = vadd.f32 0.0, %v457
    %v459 = vpop.f32.mrb[0].mxu0
    %460 = vdwg.mxu0
    %v461 = vadd.f32 %v159, %v458
    %v462 = vxor.u32 %v461, 2147483648
    %v463 = vmul.f32 %v462, 1.442695
    %v464 = vpow.pop %v463
    %v465 = vadd.f32 %v464, 1.0
    %v466 = vrcp.pop %v465
    %v467 = vmul.f32 1.0, %v466
    %v468 = vtanh.pop %v461
    %v469 = vmul.f32 %v467, %v379
    %471 = vrot.lane.b32.xlu0 %v468, 64
    %v472 = vpop.permute.xlu0 %471
    %v474 = vmul.f32 %v467, %v472
    %476 = vrot.lane.b32.xlu0 %v474, 32
    %v477 = vpop.permute.xlu0 %476
    %v479 = vadd.f32 %v469, %v477
    %v480 = vtanh.pop %v479
    %482 = vrot.lane.b32.xlu0 %v480, 64
    %v483 = vpop.permute.xlu0 %482
    %v485 = vmul.f32 %v467, %v483
    %487 = vrot.lane.b32.xlu0 %v485, 32
    %v488 = vpop.permute.xlu0 %487
    %v489 = vsel %vm187, %v488, 0
    %491 = vmatprep.subr.mxu0 0.0
    %492 = vmatpush1.msra.mxu0 %v46
    %493 = vmatprep.subr.mxu0 0.0
    %494 = vmatpush1.msra.mxu0 %v47
    %495 = vmatprep.subr.mxu0 0.0
    %496 = vmatpush1.msra.mxu0 %v48
    %497 = vmatprep.subr.mxu0 0.0
    %498 = vmatpush1.msra.mxu0 %v49
    %499 = vmatprep.subr.mxu0 0.0
    %500 = vmatpush1.msra.mxu0 0.0
    %501 = vmatprep.subr.mxu0 0.0
    %502 = vmatpush1.msra.mxu0 0.0
    %503 = vmatprep.subr.mxu0 0.0
    %504 = vmatpush1.msra.mxu0 0.0
    %505 = vmatprep.subr.mxu0 0.0
    %506 = vmatpush1.msra.mxu0 0.0
    %507 = vmatprep.subr.mxu0 0.0
    %508 = vmatpush1.msra.mxu0 0.0
    %509 = vmatprep.subr.mxu0 0.0
    %510 = vmatpush1.msra.mxu0 0.0
    %511 = vmatprep.subr.mxu0 0.0
    %512 = vmatpush1.msra.mxu0 0.0
    %513 = vmatprep.subr.mxu0 0.0
    %514 = vmatpush1.msra.mxu0 0.0
    %515 = vmatprep.subr.mxu0 0.0
    %516 = vmatpush1.msra.mxu0 0.0
    %517 = vmatprep.subr.mxu0 0.0
    %518 = vmatpush1.msra.mxu0 0.0
    %519 = vmatprep.subr.mxu0 0.0
    %520 = vmatpush1.msra.mxu0 0.0
    %521 = vmatprep.subr.mxu0 0.0
    %522 = vmatpush1.msra.mxu0 0.0
    %523 = vmatprep.subr.mxu0 0.0
    %524 = vmatpush1.msra.mxu0 0.0
    %525 = vmatprep.subr.mxu0 0.0
    %526 = vmatpush1.msra.mxu0 0.0
    %527 = vmatprep.subr.mxu0 0.0
    %528 = vmatpush1.msra.mxu0 0.0
    %529 = vmatprep.subr.mxu0 0.0
    %530 = vmatpush1.msra.mxu0 0.0
    %531 = vmatprep.subr.mxu0 0.0
    %532 = vmatpush1.msra.mxu0 0.0
    %533 = vmatprep.subr.mxu0 0.0
    %534 = vmatpush1.msra.mxu0 0.0
    %535 = vmatprep.subr.mxu0 0.0
    %536 = vmatpush1.msra.mxu0 0.0
    %537 = vmatprep.subr.mxu0 0.0
    %538 = vmatpush1.msra.mxu0 0.0
    %539 = vmatprep.subr.mxu0 0.0
    %540 = vmatpush1.msra.mxu0 0.0
    %541 = vmatprep.subr.mxu0 0.0
    %542 = vmatpush1.msra.mxu0 0.0
    %543 = vmatprep.subr.mxu0 0.0
    %544 = vmatpush1.msra.mxu0 0.0
    %545 = vmatprep.subr.mxu0 0.0
    %546 = vmatpush1.msra.mxu0 0.0
    %547 = vmatprep.subr.mxu0 0.0
    %548 = vmatpush1.msra.mxu0 0.0
    %549 = vmatprep.subr.mxu0 0.0
    %550 = vmatpush1.msra.mxu0 0.0
    %551 = vmatprep.subr.mxu0 0.0
    %552 = vmatpush1.msra.mxu0 0.0
    %553 = vmatprep.subr.mxu0 0.0
    %554 = vmatpush1.msra.mxu0 0.0
    %555 = vmatprep.mubr.f32.mxu0 0.0
    %556 = vmatmul.mubr.f32.gmra.mrb[0].mxu0 %v489
    %v557 = vpop.f32.mrb[0].mxu0
    %v558 = vadd.f32 0.0, %v557
    %v559 = vpop.f32.mrb[0].mxu0
    %560 = vdwg.mxu0
    %v561 = vadd.f32 %v164, %v558
    %v562 = vxor.u32 %v561, 2147483648
    %v563 = vmul.f32 %v562, 1.442695
    %v564 = vpow.pop %v563
    %v565 = vadd.f32 %v564, 1.0
    %v566 = vrcp.pop %v565
    %v567 = vmul.f32 1.0, %v566
    %v568 = vtanh.pop %v561
    %v569 = vmul.f32 %v567, %v479
    %571 = vrot.lane.b32.xlu0 %v568, 64
    %v572 = vpop.permute.xlu0 %571
    %v574 = vmul.f32 %v567, %v572
    %576 = vrot.lane.b32.xlu0 %v574, 32
    %v577 = vpop.permute.xlu0 %576
    %v579 = vadd.f32 %v569, %v577
    %v580 = vtanh.pop %v579
    %582 = vrot.lane.b32.xlu0 %v580, 64
    %v583 = vpop.permute.xlu0 %582
    %v585 = vmul.f32 %v567, %v583
    %587 = vrot.lane.b32.xlu0 %v585, 32
    %v588 = vpop.permute.xlu0 %587
    %v589 = vsel %vm187, %v588, 0
    %591 = vmatprep.subr.mxu0 0.0
    %592 = vmatpush1.msra.mxu0 %v46
    %593 = vmatprep.subr.mxu0 0.0
    %594 = vmatpush1.msra.mxu0 %v47
    %595 = vmatprep.subr.mxu0 0.0
    %596 = vmatpush1.msra.mxu0 %v48
    %597 = vmatprep.subr.mxu0 0.0
    %598 = vmatpush1.msra.mxu0 %v49
    %599 = vmatprep.subr.mxu0 0.0
    %600 = vmatpush1.msra.mxu0 0.0
    %601 = vmatprep.subr.mxu0 0.0
    %602 = vmatpush1.msra.mxu0 0.0
    %603 = vmatprep.subr.mxu0 0.0
    %604 = vmatpush1.msra.mxu0 0.0
    %605 = vmatprep.subr.mxu0 0.0
    %606 = vmatpush1.msra.mxu0 0.0
    %607 = vmatprep.subr.mxu0 0.0
    %608 = vmatpush1.msra.mxu0 0.0
    %609 = vmatprep.subr.mxu0 0.0
    %610 = vmatpush1.msra.mxu0 0.0
    %611 = vmatprep.subr.mxu0 0.0
    %612 = vmatpush1.msra.mxu0 0.0
    %613 = vmatprep.subr.mxu0 0.0
    %614 = vmatpush1.msra.mxu0 0.0
    %615 = vmatprep.subr.mxu0 0.0
    %616 = vmatpush1.msra.mxu0 0.0
    %617 = vmatprep.subr.mxu0 0.0
    %618 = vmatpush1.msra.mxu0 0.0
    %619 = vmatprep.subr.mxu0 0.0
    %620 = vmatpush1.msra.mxu0 0.0
    %621 = vmatprep.subr.mxu0 0.0
    %622 = vmatpush1.msra.mxu0 0.0
    %623 = vmatprep.subr.mxu0 0.0
    %624 = vmatpush1.msra.mxu0 0.0
    %625 = vmatprep.subr.mxu0 0.0
    %626 = vmatpush1.msra.mxu0 0.0
    %627 = vmatprep.subr.mxu0 0.0
    %628 = vmatpush1.msra.mxu0 0.0
    %629 = vmatprep.subr.mxu0 0.0
    %630 = vmatpush1.msra.mxu0 0.0
    %631 = vmatprep.subr.mxu0 0.0
    %632 = vmatpush1.msra.mxu0 0.0
    %633 = vmatprep.subr.mxu0 0.0
    %634 = vmatpush1.msra.mxu0 0.0
    %635 = vmatprep.subr.mxu0 0.0
    %636 = vmatpush1.msra.mxu0 0.0
    %637 = vmatprep.subr.mxu0 0.0
    %638 = vmatpush1.msra.mxu0 0.0
    %639 = vmatprep.subr.mxu0 0.0
    %640 = vmatpush1.msra.mxu0 0.0
    %641 = vmatprep.subr.mxu0 0.0
    %642 = vmatpush1.msra.mxu0 0.0
    %643 = vmatprep.subr.mxu0 0.0
    %644 = vmatpush1.msra.mxu0 0.0
    %645 = vmatprep.subr.mxu0 0.0
    %646 = vmatpush1.msra.mxu0 0.0
    %647 = vmatprep.subr.mxu0 0.0
    %648 = vmatpush1.msra.mxu0 0.0
    %649 = vmatprep.subr.mxu0 0.0
    %650 = vmatpush1.msra.mxu0 0.0
    %651 = vmatprep.subr.mxu0 0.0
    %652 = vmatpush1.msra.mxu0 0.0
    %653 = vmatprep.subr.mxu0 0.0
    %654 = vmatpush1.msra.mxu0 0.0
    %655 = vmatprep.mubr.f32.mxu0 0.0
    %656 = vmatmul.mubr.f32.gmra.mrb[0].mxu0 %v589
    %v657 = vpop.f32.mrb[0].mxu0
    %v658 = vadd.f32 0.0, %v657
    %v659 = vpop.f32.mrb[0].mxu0
    %660 = vdwg.mxu0
    %v661 = vadd.f32 %v169, %v658
    %v662 = vxor.u32 %v661, 2147483648
    %v663 = vmul.f32 %v662, 1.442695
    %v664 = vpow.pop %v663
    %v665 = vadd.f32 %v664, 1.0
    %v666 = vrcp.pop %v665
    %v667 = vmul.f32 1.0, %v666
    %v668 = vtanh.pop %v661
    %v669 = vmul.f32 %v667, %v579
    %671 = vrot.lane.b32.xlu0 %v668, 64
    %v672 = vpop.permute.xlu0 %671
    %v674 = vmul.f32 %v667, %v672
    %676 = vrot.lane.b32.xlu0 %v674, 32
    %v677 = vpop.permute.xlu0 %676
    %v679 = vadd.f32 %v669, %v677
    %v680 = vtanh.pop %v679
    %682 = vrot.lane.b32.xlu0 %v680, 64
    %v683 = vpop.permute.xlu0 %682
    %v685 = vmul.f32 %v667, %v683
    %687 = vrot.lane.b32.xlu0 %v685, 32
    %v688 = vpop.permute.xlu0 %687
    %v689 = vsel %vm187, %v688, 0
    %691 = vmatprep.subr.mxu0 0.0
    %692 = vmatpush1.msra.mxu0 %v46
    %693 = vmatprep.subr.mxu0 0.0
    %694 = vmatpush1.msra.mxu0 %v47
    %695 = vmatprep.subr.mxu0 0.0
    %696 = vmatpush1.msra.mxu0 %v48
    %697 = vmatprep.subr.mxu0 0.0
    %698 = vmatpush1.msra.mxu0 %v49
    %699 = vmatprep.subr.mxu0 0.0
    %700 = vmatpush1.msra.mxu0 0.0
    %701 = vmatprep.subr.mxu0 0.0
    %702 = vmatpush1.msra.mxu0 0.0
    %703 = vmatprep.subr.mxu0 0.0
    %704 = vmatpush1.msra.mxu0 0.0
    %705 = vmatprep.subr.mxu0 0.0
    %706 = vmatpush1.msra.mxu0 0.0
    %707 = vmatprep.subr.mxu0 0.0
    %708 = vmatpush1.msra.mxu0 0.0
    %709 = vmatprep.subr.mxu0 0.0
    %710 = vmatpush1.msra.mxu0 0.0
    %711 = vmatprep.subr.mxu0 0.0
    %712 = vmatpush1.msra.mxu0 0.0
    %713 = vmatprep.subr.mxu0 0.0
    %714 = vmatpush1.msra.mxu0 0.0
    %715 = vmatprep.subr.mxu0 0.0
    %716 = vmatpush1.msra.mxu0 0.0
    %717 = vmatprep.subr.mxu0 0.0
    %718 = vmatpush1.msra.mxu0 0.0
    %719 = vmatprep.subr.mxu0 0.0
    %720 = vmatpush1.msra.mxu0 0.0
    %721 = vmatprep.subr.mxu0 0.0
    %722 = vmatpush1.msra.mxu0 0.0
    %723 = vmatprep.subr.mxu0 0.0
    %724 = vmatpush1.msra.mxu0 0.0
    %725 = vmatprep.subr.mxu0 0.0
    %726 = vmatpush1.msra.mxu0 0.0
    %727 = vmatprep.subr.mxu0 0.0
    %728 = vmatpush1.msra.mxu0 0.0
    %729 = vmatprep.subr.mxu0 0.0
    %730 = vmatpush1.msra.mxu0 0.0
    %731 = vmatprep.subr.mxu0 0.0
    %732 = vmatpush1.msra.mxu0 0.0
    %733 = vmatprep.subr.mxu0 0.0
    %734 = vmatpush1.msra.mxu0 0.0
    %735 = vmatprep.subr.mxu0 0.0
    %736 = vmatpush1.msra.mxu0 0.0
    %737 = vmatprep.subr.mxu0 0.0
    %738 = vmatpush1.msra.mxu0 0.0
    %739 = vmatprep.subr.mxu0 0.0
    %740 = vmatpush1.msra.mxu0 0.0
    %741 = vmatprep.subr.mxu0 0.0
    %742 = vmatpush1.msra.mxu0 0.0
    %743 = vmatprep.subr.mxu0 0.0
    %744 = vmatpush1.msra.mxu0 0.0
    %745 = vmatprep.subr.mxu0 0.0
    %746 = vmatpush1.msra.mxu0 0.0
    %747 = vmatprep.subr.mxu0 0.0
    %748 = vmatpush1.msra.mxu0 0.0
    %749 = vmatprep.subr.mxu0 0.0
    %750 = vmatpush1.msra.mxu0 0.0
    %751 = vmatprep.subr.mxu0 0.0
    %752 = vmatpush1.msra.mxu0 0.0
    %753 = vmatprep.subr.mxu0 0.0
    %754 = vmatpush1.msra.mxu0 0.0
    %755 = vmatprep.mubr.f32.mxu0 0.0
    %756 = vmatmul.mubr.f32.gmra.mrb[0].mxu0 %v689
    %v757 = vpop.f32.mrb[0].mxu0
    %v758 = vadd.f32 0.0, %v757
    %v759 = vpop.f32.mrb[0].mxu0
    %760 = vdwg.mxu0
    %v761 = vadd.f32 %v174, %v758
    %v762 = vxor.u32 %v761, 2147483648
    %v763 = vmul.f32 %v762, 1.442695
    %v764 = vpow.pop %v763
    %v765 = vadd.f32 %v764, 1.0
    %v766 = vrcp.pop %v765
    %v767 = vmul.f32 1.0, %v766
    %v768 = vtanh.pop %v761
    %v769 = vmul.f32 %v767, %v679
    %771 = vrot.lane.b32.xlu0 %v768, 64
    %v772 = vpop.permute.xlu0 %771
    %v774 = vmul.f32 %v767, %v772
    %776 = vrot.lane.b32.xlu0 %v774, 32
    %v777 = vpop.permute.xlu0 %776
    %v779 = vadd.f32 %v769, %v777
    %v780 = vtanh.pop %v779
    %782 = vrot.lane.b32.xlu0 %v780, 64
    %v783 = vpop.permute.xlu0 %782
    %v785 = vmul.f32 %v767, %v783
    %787 = vrot.lane.b32.xlu0 %v785, 32
    %v788 = vpop.permute.xlu0 %787
    %v789 = vsel %vm187, %v788, 0
    %791 = vmatprep.subr.mxu0 0.0
    %792 = vmatpush1.msra.mxu0 %v46
    %793 = vmatprep.subr.mxu0 0.0
    %794 = vmatpush1.msra.mxu0 %v47
    %795 = vmatprep.subr.mxu0 0.0
    %796 = vmatpush1.msra.mxu0 %v48
    %797 = vmatprep.subr.mxu0 0.0
    %798 = vmatpush1.msra.mxu0 %v49
    %799 = vmatprep.subr.mxu0 0.0
    %800 = vmatpush1.msra.mxu0 0.0
    %801 = vmatprep.subr.mxu0 0.0
    %802 = vmatpush1.msra.mxu0 0.0
    %803 = vmatprep.subr.mxu0 0.0
    %804 = vmatpush1.msra.mxu0 0.0
    %805 = vmatprep.subr.mxu0 0.0
    %806 = vmatpush1.msra.mxu0 0.0
    %807 = vmatprep.subr.mxu0 0.0
    %808 = vmatpush1.msra.mxu0 0.0
    %809 = vmatprep.subr.mxu0 0.0
    %810 = vmatpush1.msra.mxu0 0.0
    %811 = vmatprep.subr.mxu0 0.0
    %812 = vmatpush1.msra.mxu0 0.0
    %813 = vmatprep.subr.mxu0 0.0
    %814 = vmatpush1.msra.mxu0 0.0
    %815 = vmatprep.subr.mxu0 0.0
    %816 = vmatpush1.msra.mxu0 0.0
    %817 = vmatprep.subr.mxu0 0.0
    %818 = vmatpush1.msra.mxu0 0.0
    %819 = vmatprep.subr.mxu0 0.0
    %820 = vmatpush1.msra.mxu0 0.0
    %821 = vmatprep.subr.mxu0 0.0
    %822 = vmatpush1.msra.mxu0 0.0
    %823 = vmatprep.subr.mxu0 0.0
    %824 = vmatpush1.msra.mxu0 0.0
    %825 = vmatprep.subr.mxu0 0.0
    %826 = vmatpush1.msra.mxu0 0.0
    %827 = vmatprep.subr.mxu0 0.0
    %828 = vmatpush1.msra.mxu0 0.0
    %829 = vmatprep.subr.mxu0 0.0
    %830 = vmatpush1.msra.mxu0 0.0
    %831 = vmatprep.subr.mxu0 0.0
    %832 = vmatpush1.msra.mxu0 0.0
    %833 = vmatprep.subr.mxu0 0.0
    %834 = vmatpush1.msra.mxu0 0.0
    %835 = vmatprep.subr.mxu0 0.0
    %836 = vmatpush1.msra.mxu0 0.0
    %837 = vmatprep.subr.mxu0 0.0
    %838 = vmatpush1.msra.mxu0 0.0
    %839 = vmatprep.subr.mxu0 0.0
    %840 = vmatpush1.msra.mxu0 0.0
    %841 = vmatprep.subr.mxu0 0.0
    %842 = vmatpush1.msra.mxu0 0.0
    %843 = vmatprep.subr.mxu0 0.0
    %844 = vmatpush1.msra.mxu0 0.0
    %845 = vmatprep.subr.mxu0 0.0
    %846 = vmatpush1.msra.mxu0 0.0
    %847 = vmatprep.subr.mxu0 0.0
    %848 = vmatpush1.msra.mxu0 0.0
    %849 = vmatprep.subr.mxu0 0.0
    %850 = vmatpush1.msra.mxu0 0.0
    %851 = vmatprep.subr.mxu0 0.0
    %852 = vmatpush1.msra.mxu0 0.0
    %853 = vmatprep.subr.mxu0 0.0
    %854 = vmatpush1.msra.mxu0 0.0
    %855 = vmatprep.mubr.f32.mxu0 0.0
    %856 = vmatmul.mubr.f32.gmra.mrb[0].mxu0 %v789
    %v857 = vpop.f32.mrb[0].mxu0
    %v858 = vadd.f32 0.0, %v857
    %v859 = vpop.f32.mrb[0].mxu0
    %860 = vdwg.mxu0
    %v861 = vadd.f32 %v179, %v858
    %v862 = vxor.u32 %v861, 2147483648
    %v863 = vmul.f32 %v862, 1.442695
    %v864 = vpow.pop %v863
    %v865 = vadd.f32 %v864, 1.0
    %v866 = vrcp.pop %v865
    %v867 = vmul.f32 1.0, %v866
    %v868 = vtanh.pop %v861
    %v869 = vmul.f32 %v867, %v779
    %871 = vrot.lane.b32.xlu0 %v868, 64
    %v872 = vpop.permute.xlu0 %871
    %v874 = vmul.f32 %v867, %v872
    %876 = vrot.lane.b32.xlu0 %v874, 32
    %v877 = vpop.permute.xlu0 %876
    %v879 = vadd.f32 %v869, %v877
    %v880 = vtanh.pop %v879
    %882 = vrot.lane.b32.xlu0 %v880, 64
    %v883 = vpop.permute.xlu0 %882
    %v885 = vmul.f32 %v867, %v883
    %887 = vrot.lane.b32.xlu0 %v885, 32
    %v888 = vpop.permute.xlu0 %887
    %v889 = vsel %vm187, %v888, 0
    %891 = vmatprep.subr.mxu0 0.0
    %892 = vmatpush1.msra.mxu0 %v46
    %893 = vmatprep.subr.mxu0 0.0
    %894 = vmatpush1.msra.mxu0 %v47
    %895 = vmatprep.subr.mxu0 0.0
    %896 = vmatpush1.msra.mxu0 %v48
    %897 = vmatprep.subr.mxu0 0.0
    %898 = vmatpush1.msra.mxu0 %v49
    %899 = vmatprep.subr.mxu0 0.0
    %900 = vmatpush1.msra.mxu0 0.0
    %901 = vmatprep.subr.mxu0 0.0
    %902 = vmatpush1.msra.mxu0 0.0
    %903 = vmatprep.subr.mxu0 0.0
    %904 = vmatpush1.msra.mxu0 0.0
    %905 = vmatprep.subr.mxu0 0.0
    %906 = vmatpush1.msra.mxu0 0.0
    %907 = vmatprep.subr.mxu0 0.0
    %908 = vmatpush1.msra.mxu0 0.0
    %909 = vmatprep.subr.mxu0 0.0
    %910 = vmatpush1.msra.mxu0 0.0
    %911 = vmatprep.subr.mxu0 0.0
    %912 = vmatpush1.msra.mxu0 0.0
    %913 = vmatprep.subr.mxu0 0.0
    %914 = vmatpush1.msra.mxu0 0.0
    %915 = vmatprep.subr.mxu0 0.0
    %916 = vmatpush1.msra.mxu0 0.0
    %917 = vmatprep.subr.mxu0 0.0
    %918 = vmatpush1.msra.mxu0 0.0
    %919 = vmatprep.subr.mxu0 0.0
    %920 = vmatpush1.msra.mxu0 0.0
    %921 = vmatprep.subr.mxu0 0.0
    %922 = vmatpush1.msra.mxu0 0.0
    %923 = vmatprep.subr.mxu0 0.0
    %924 = vmatpush1.msra.mxu0 0.0
    %925 = vmatprep.subr.mxu0 0.0
    %926 = vmatpush1.msra.mxu0 0.0
    %927 = vmatprep.subr.mxu0 0.0
    %928 = vmatpush1.msra.mxu0 0.0
    %929 = vmatprep.subr.mxu0 0.0
    %930 = vmatpush1.msra.mxu0 0.0
    %931 = vmatprep.subr.mxu0 0.0
    %932 = vmatpush1.msra.mxu0 0.0
    %933 = vmatprep.subr.mxu0 0.0
    %934 = vmatpush1.msra.mxu0 0.0
    %935 = vmatprep.subr.mxu0 0.0
    %936 = vmatpush1.msra.mxu0 0.0
    %937 = vmatprep.subr.mxu0 0.0
    %938 = vmatpush1.msra.mxu0 0.0
    %939 = vmatprep.subr.mxu0 0.0
    %940 = vmatpush1.msra.mxu0 0.0
    %941 = vmatprep.subr.mxu0 0.0
    %942 = vmatpush1.msra.mxu0 0.0
    %943 = vmatprep.subr.mxu0 0.0
    %944 = vmatpush1.msra.mxu0 0.0
    %945 = vmatprep.subr.mxu0 0.0
    %946 = vmatpush1.msra.mxu0 0.0
    %947 = vmatprep.subr.mxu0 0.0
    %948 = vmatpush1.msra.mxu0 0.0
    %949 = vmatprep.subr.mxu0 0.0
    %950 = vmatpush1.msra.mxu0 0.0
    %951 = vmatprep.subr.mxu0 0.0
    %952 = vmatpush1.msra.mxu0 0.0
    %953 = vmatprep.subr.mxu0 0.0
    %954 = vmatpush1.msra.mxu0 0.0
    %955 = vmatprep.mubr.f32.mxu0 0.0
    %956 = vmatmul.mubr.f32.gmra.mrb[0].mxu0 %v889
    %v957 = vpop.f32.mrb[0].mxu0
    %v958 = vadd.f32 0.0, %v957
    %v959 = vpop.f32.mrb[0].mxu0
    %960 = vdwg.mxu0
    %v961 = vadd.f32 %v184, %v958
    %v962 = vxor.u32 %v961, 2147483648
    %v963 = vmul.f32 %v962, 1.442695
    %v964 = vpow.pop %v963
    %v965 = vadd.f32 %v964, 1.0
    %v966 = vrcp.pop %v965
    %v967 = vmul.f32 1.0, %v966
    %v968 = vtanh.pop %v961
    %v969 = vmul.f32 %v967, %v879
    %971 = vrot.lane.b32.xlu0 %v968, 64
    %v972 = vpop.permute.xlu0 %971
    %v974 = vmul.f32 %v967, %v972
    %976 = vrot.lane.b32.xlu0 %v974, 32
    %v977 = vpop.permute.xlu0 %976
    %v979 = vadd.f32 %v969, %v977
    %v980 = vtanh.pop %v979
    %982 = vrot.lane.b32.xlu0 %v980, 64
    %v983 = vpop.permute.xlu0 %982
    %v985 = vmul.f32 %v967, %v983
    %v986 = vld [vmem:[%s4] sm:$0xff]
    %v987 = vld [vmem:[%s4 + $0x8] sm:$0xff]
    %v988 = vld [vmem:[%s4 + $0x10] sm:$0xff]
    %v989 = vld [vmem:[%s4 + $0x18] sm:$0xff]
    %v990 = vld [vmem:[%s5] sm:$0xff]
    %v991 = vld [vmem:[%s5 + $0x8] sm:$0xff]
    %v992 = vld [vmem:[%s5 + $0x10] sm:$0xff]
    %v993 = vld [vmem:[%s5 + $0x18] sm:$0xff]
    %v994 = vld [vmem:[%s6] sm:$0x1]
    %v996 = vlaneseq
    %v997 = vshrl.u32 %v996, 7
    %v998 = vsub.s32 0, %v997
    %v999 = vrot.slane %v994, %v998
    %1002 = vrot.lane.b32.xlu0 %v985, 32
    %v1003 = vpop.permute.xlu0 %1002
    %v1004 = vsel %vm187, %v1003, 0
    %1006 = vmatprep.subr.mxu0 0.0
    %1007 = vmatpush1.msra.mxu0 %v986
    %1008 = vmatprep.subr.mxu0 0.0
    %1009 = vmatpush1.msra.mxu0 %v987
    %1010 = vmatprep.subr.mxu0 0.0
    %1011 = vmatpush1.msra.mxu0 %v988
    %1012 = vmatprep.subr.mxu0 0.0
    %1013 = vmatpush1.msra.mxu0 %v989
    %1014 = vmatprep.subr.mxu0 0.0
    %1015 = vmatpush1.msra.mxu0 0.0
    %1016 = vmatprep.subr.mxu0 0.0
    %1017 = vmatpush1.msra.mxu0 0.0
    %1018 = vmatprep.subr.mxu0 0.0
    %1019 = vmatpush1.msra.mxu0 0.0
    %1020 = vmatprep.subr.mxu0 0.0
    %1021 = vmatpush1.msra.mxu0 0.0
    %1022 = vmatprep.subr.mxu0 0.0
    %1023 = vmatpush1.msra.mxu0 0.0
    %1024 = vmatprep.subr.mxu0 0.0
    %1025 = vmatpush1.msra.mxu0 0.0
    %1026 = vmatprep.subr.mxu0 0.0
    %1027 = vmatpush1.msra.mxu0 0.0
    %1028 = vmatprep.subr.mxu0 0.0
    %1029 = vmatpush1.msra.mxu0 0.0
    %1030 = vmatprep.subr.mxu0 0.0
    %1031 = vmatpush1.msra.mxu0 0.0
    %1032 = vmatprep.subr.mxu0 0.0
    %1033 = vmatpush1.msra.mxu0 0.0
    %1034 = vmatprep.subr.mxu0 0.0
    %1035 = vmatpush1.msra.mxu0 0.0
    %1036 = vmatprep.subr.mxu0 0.0
    %1037 = vmatpush1.msra.mxu0 0.0
    %1038 = vmatprep.subr.mxu0 0.0
    %1039 = vmatpush1.msra.mxu0 0.0
    %1040 = vmatprep.subr.mxu0 0.0
    %1041 = vmatpush1.msra.mxu0 0.0
    %1042 = vmatprep.subr.mxu0 0.0
    %1043 = vmatpush1.msra.mxu0 0.0
    %1044 = vmatprep.subr.mxu0 0.0
    %1045 = vmatpush1.msra.mxu0 0.0
    %1046 = vmatprep.subr.mxu0 0.0
    %1047 = vmatpush1.msra.mxu0 0.0
    %1048 = vmatprep.subr.mxu0 0.0
    %1049 = vmatpush1.msra.mxu0 0.0
    %1050 = vmatprep.subr.mxu0 0.0
    %1051 = vmatpush1.msra.mxu0 0.0
    %1052 = vmatprep.subr.mxu0 0.0
    %1053 = vmatpush1.msra.mxu0 0.0
    %1054 = vmatprep.subr.mxu0 0.0
    %1055 = vmatpush1.msra.mxu0 0.0
    %1056 = vmatprep.subr.mxu0 0.0
    %1057 = vmatpush1.msra.mxu0 0.0
    %1058 = vmatprep.subr.mxu0 0.0
    %1059 = vmatpush1.msra.mxu0 0.0
    %1060 = vmatprep.subr.mxu0 0.0
    %1061 = vmatpush1.msra.mxu0 0.0
    %1062 = vmatprep.subr.mxu0 0.0
    %1063 = vmatpush1.msra.mxu0 0.0
    %1064 = vmatprep.subr.mxu0 0.0
    %1065 = vmatpush1.msra.mxu0 0.0
    %1066 = vmatprep.subr.mxu0 0.0
    %1067 = vmatpush1.msra.mxu0 0.0
    %1068 = vmatprep.subr.mxu0 0.0
    %1069 = vmatpush1.msra.mxu0 0.0
    %1070 = vmatprep.mubr.f32.mxu0 0.0
    %1071 = vmatmul.mubr.f32.gmra.mrb[0].mxu0 %v289
    %v1072 = vpop.f32.mrb[0].mxu0
    %v1073 = vadd.f32 %v999, %v1072
    %v1074 = vpop.f32.mrb[0].mxu0
    %1075 = vmatprep.mubr.f32.mxu0 0.0
    %1076 = vmatmul.mubr.f32.gmra.mrb[0].mxu0 %v389
    %v1077 = vpop.f32.mrb[0].mxu0
    %v1078 = vadd.f32 %v999, %v1077
    %v1079 = vpop.f32.mrb[0].mxu0
    %1080 = vmatprep.mubr.f32.mxu0 0.0
    %1081 = vmatmul.mubr.f32.gmra.mrb[0].mxu0 %v489
    %v1082 = vpop.f32.mrb[0].mxu0
    %v1083 = vadd.f32 %v999, %v1082
    %v1084 = vpop.f32.mrb[0].mxu0
    %1085 = vmatprep.mubr.f32.mxu0 0.0
    %1086 = vmatmul.mubr.f32.gmra.mrb[0].mxu0 %v589
    %v1087 = vpop.f32.mrb[0].mxu0
    %v1088 = vadd.f32 %v999, %v1087
    %v1089 = vpop.f32.mrb[0].mxu0
    %1090 = vmatprep.mubr.f32.mxu0 0.0
    %1091 = vmatmul.mubr.f32.gmra.mrb[0].mxu0 %v689
    %v1092 = vpop.f32.mrb[0].mxu0
    %v1093 = vadd.f32 %v999, %v1092
    %v1094 = vpop.f32.mrb[0].mxu0
    %1095 = vmatprep.mubr.f32.mxu0 0.0
    %1096 = vmatmul.mubr.f32.gmra.mrb[0].mxu0 %v789
    %v1097 = vpop.f32.mrb[0].mxu0
    %v1098 = vadd.f32 %v999, %v1097
    %v1099 = vpop.f32.mrb[0].mxu0
    %1100 = vmatprep.mubr.f32.mxu0 0.0
    %1101 = vmatmul.mubr.f32.gmra.mrb[0].mxu0 %v889
    %v1102 = vpop.f32.mrb[0].mxu0
    %v1103 = vadd.f32 %v999, %v1102
    %v1104 = vpop.f32.mrb[0].mxu0
    %1105 = vmatprep.mubr.f32.mxu0 0.0
    %1106 = vmatmul.mubr.f32.gmra.mrb[0].mxu0 %v1004
    %v1107 = vpop.f32.mrb[0].mxu0
    %v1108 = vadd.f32 %v999, %v1107
    %v1109 = vpop.f32.mrb[0].mxu0
    %1110 = vdwg.mxu0
    %1111 = vmatprep.subr.mxu0 0.0
    %1112 = vmatpush1.msra.mxu0 %v990
    %1113 = vmatprep.subr.mxu0 0.0
    %1114 = vmatpush1.msra.mxu0 %v991
    %1115 = vmatprep.subr.mxu0 0.0
    %1116 = vmatpush1.msra.mxu0 %v992
    %1117 = vmatprep.subr.mxu0 0.0
    %1118 = vmatpush1.msra.mxu0 %v993
    %1119 = vmatprep.subr.mxu0 0.0
    %1120 = vmatpush1.msra.mxu0 0.0
    %1121 = vmatprep.subr.mxu0 0.0
    %1122 = vmatpush1.msra.mxu0 0.0
    %1123 = vmatprep.subr.mxu0 0.0
    %1124 = vmatpush1.msra.mxu0 0.0
    %1125 = vmatprep.subr.mxu0 0.0
    %1126 = vmatpush1.msra.mxu0 0.0
    %1127 = vmatprep.subr.mxu0 0.0
    %1128 = vmatpush1.msra.mxu0 0.0
    %1129 = vmatprep.subr.mxu0 0.0
    %1130 = vmatpush1.msra.mxu0 0.0
    %1131 = vmatprep.subr.mxu0 0.0
    %1132 = vmatpush1.msra.mxu0 0.0
    %1133 = vmatprep.subr.mxu0 0.0
    %1134 = vmatpush1.msra.mxu0 0.0
    %1135 = vmatprep.subr.mxu0 0.0
    %1136 = vmatpush1.msra.mxu0 0.0
    %1137 = vmatprep.subr.mxu0 0.0
    %1138 = vmatpush1.msra.mxu0 0.0
    %1139 = vmatprep.subr.mxu0 0.0
    %1140 = vmatpush1.msra.mxu0 0.0
    %1141 = vmatprep.subr.mxu0 0.0
    %1142 = vmatpush1.msra.mxu0 0.0
    %1143 = vmatprep.subr.mxu0 0.0
    %1144 = vmatpush1.msra.mxu0 0.0
    %1145 = vmatprep.subr.mxu0 0.0
    %1146 = vmatpush1.msra.mxu0 0.0
    %1147 = vmatprep.subr.mxu0 0.0
    %1148 = vmatpush1.msra.mxu0 0.0
    %1149 = vmatprep.subr.mxu0 0.0
    %1150 = vmatpush1.msra.mxu0 0.0
    %1151 = vmatprep.subr.mxu0 0.0
    %1152 = vmatpush1.msra.mxu0 0.0
    %1153 = vmatprep.subr.mxu0 0.0
    %1154 = vmatpush1.msra.mxu0 0.0
    %1155 = vmatprep.subr.mxu0 0.0
    %1156 = vmatpush1.msra.mxu0 0.0
    %1157 = vmatprep.subr.mxu0 0.0
    %1158 = vmatpush1.msra.mxu0 0.0
    %1159 = vmatprep.subr.mxu0 0.0
    %1160 = vmatpush1.msra.mxu0 0.0
    %1161 = vmatprep.subr.mxu0 0.0
    %1162 = vmatpush1.msra.mxu0 0.0
    %1163 = vmatprep.subr.mxu0 0.0
    %1164 = vmatpush1.msra.mxu0 0.0
    %1165 = vmatprep.subr.mxu0 0.0
    %1166 = vmatpush1.msra.mxu0 0.0
    %1167 = vmatprep.subr.mxu0 0.0
    %1168 = vmatpush1.msra.mxu0 0.0
    %1169 = vmatprep.subr.mxu0 0.0
    %1170 = vmatpush1.msra.mxu0 0.0
    %1171 = vmatprep.subr.mxu0 0.0
    %1172 = vmatpush1.msra.mxu0 0.0
    %1173 = vmatprep.subr.mxu0 0.0
    %1174 = vmatpush1.msra.mxu0 0.0
    %1175 = vmatprep.mubr.f32.mxu0 0.0
    %1176 = vmatmul.mubr.f32.gmra.mrb[0].mxu0 %v189
    %v1177 = vpop.f32.mrb[0].mxu0
    %v1178 = vadd.f32 0.0, %v1177
    %v1179 = vpop.f32.mrb[0].mxu0
    %1180 = vdwg.mxu0
    %v1181 = vadd.f32 %v1073, %v1178
    %v1182 = vxor.u32 %v1181, 2147483648
    %v1183 = vmul.f32 %v1182, 1.442695
    %v1184 = vpow.pop %v1183
    %v1185 = vadd.f32 %v1184, 1.0
    %v1186 = vrcp.pop %v1185
    %v1187 = vmul.f32 1.0, %v1186
    %v1188 = vtanh.pop %v1181
    %v1189 = vmul.f32 %v1187, 0.0
    %1191 = vrot.lane.b32.xlu0 %v1188, 64
    %v1192 = vpop.permute.xlu0 %1191
    %v1194 = vmul.f32 %v1187, %v1192
    %1196 = vrot.lane.b32.xlu0 %v1194, 32
    %v1197 = vpop.permute.xlu0 %1196
    %v1199 = vadd.f32 %v1189, %v1197
    %v1200 = vtanh.pop %v1199
    %1202 = vrot.lane.b32.xlu0 %v1200, 64
    %v1203 = vpop.permute.xlu0 %1202
    %v1205 = vmul.f32 %v1187, %v1203
    %1207 = vrot.lane.b32.xlu0 %v1205, 32
    %v1208 = vpop.permute.xlu0 %1207
    %v1209 = vsel %vm187, %v1208, 0
    %1211 = vmatprep.subr.mxu0 0.0
    %1212 = vmatpush1.msra.mxu0 %v990
    %1213 = vmatprep.subr.mxu0 0.0
    %1214 = vmatpush1.msra.mxu0 %v991
    %1215 = vmatprep.subr.mxu0 0.0
    %1216 = vmatpush1.msra.mxu0 %v992
    %1217 = vmatprep.subr.mxu0 0.0
    %1218 = vmatpush1.msra.mxu0 %v993
    %1219 = vmatprep.subr.mxu0 0.0
    %1220 = vmatpush1.msra.mxu0 0.0
    %1221 = vmatprep.subr.mxu0 0.0
    %1222 = vmatpush1.msra.mxu0 0.0
    %1223 = vmatprep.subr.mxu0 0.0
    %1224 = vmatpush1.msra.mxu0 0.0
    %1225 = vmatprep.subr.mxu0 0.0
    %1226 = vmatpush1.msra.mxu0 0.0
    %1227 = vmatprep.subr.mxu0 0.0
    %1228 = vmatpush1.msra.mxu0 0.0
    %1229 = vmatprep.subr.mxu0 0.0
    %1230 = vmatpush1.msra.mxu0 0.0
    %1231 = vmatprep.subr.mxu0 0.0
    %1232 = vmatpush1.msra.mxu0 0.0
    %1233 = vmatprep.subr.mxu0 0.0
    %1234 = vmatpush1.msra.mxu0 0.0
    %1235 = vmatprep.subr.mxu0 0.0
    %1236 = vmatpush1.msra.mxu0 0.0
    %1237 = vmatprep.subr.mxu0 0.0
    %1238 = vmatpush1.msra.mxu0 0.0
    %1239 = vmatprep.subr.mxu0 0.0
    %1240 = vmatpush1.msra.mxu0 0.0
    %1241 = vmatprep.subr.mxu0 0.0
    %1242 = vmatpush1.msra.mxu0 0.0
    %1243 = vmatprep.subr.mxu0 0.0
    %1244 = vmatpush1.msra.mxu0 0.0
    %1245 = vmatprep.subr.mxu0 0.0
    %1246 = vmatpush1.msra.mxu0 0.0
    %1247 = vmatprep.subr.mxu0 0.0
    %1248 = vmatpush1.msra.mxu0 0.0
    %1249 = vmatprep.subr.mxu0 0.0
    %1250 = vmatpush1.msra.mxu0 0.0
    %1251 = vmatprep.subr.mxu0 0.0
    %1252 = vmatpush1.msra.mxu0 0.0
    %1253 = vmatprep.subr.mxu0 0.0
    %1254 = vmatpush1.msra.mxu0 0.0
    %1255 = vmatprep.subr.mxu0 0.0
    %1256 = vmatpush1.msra.mxu0 0.0
    %1257 = vmatprep.subr.mxu0 0.0
    %1258 = vmatpush1.msra.mxu0 0.0
    %1259 = vmatprep.subr.mxu0 0.0
    %1260 = vmatpush1.msra.mxu0 0.0
    %1261 = vmatprep.subr.mxu0 0.0
    %1262 = vmatpush1.msra.mxu0 0.0
    %1263 = vmatprep.subr.mxu0 0.0
    %1264 = vmatpush1.msra.mxu0 0.0
    %1265 = vmatprep.subr.mxu0 0.0
    %1266 = vmatpush1.msra.mxu0 0.0
    %1267 = vmatprep.subr.mxu0 0.0
    %1268 = vmatpush1.msra.mxu0 0.0
    %1269 = vmatprep.subr.mxu0 0.0
    %1270 = vmatpush1.msra.mxu0 0.0
    %1271 = vmatprep.subr.mxu0 0.0
    %1272 = vmatpush1.msra.mxu0 0.0
    %1273 = vmatprep.subr.mxu0 0.0
    %1274 = vmatpush1.msra.mxu0 0.0
    %1275 = vmatprep.mubr.f32.mxu0 0.0
    %1276 = vmatmul.mubr.f32.gmra.mrb[0].mxu0 %v1209
    %v1277 = vpop.f32.mrb[0].mxu0
    %v1278 = vadd.f32 0.0, %v1277
    %v1279 = vpop.f32.mrb[0].mxu0
    %1280 = vdwg.mxu0
    %v1281 = vadd.f32 %v1078, %v1278
    %v1282 = vxor.u32 %v1281, 2147483648
    %v1283 = vmul.f32 %v1282, 1.442695
    %v1284 = vpow.pop %v1283
    %v1285 = vadd.f32 %v1284, 1.0
    %v1286 = vrcp.pop %v1285
    %v1287 = vmul.f32 1.0, %v1286
    %v1288 = vtanh.pop %v1281
    %v1289 = vmul.f32 %v1287, %v1199
    %1291 = vrot.lane.b32.xlu0 %v1288, 64
    %v1292 = vpop.permute.xlu0 %1291
    %v1294 = vmul.f32 %v1287, %v1292
    %1296 = vrot.lane.b32.xlu0 %v1294, 32
    %v1297 = vpop.permute.xlu0 %1296
    %v1299 = vadd.f32 %v1289, %v1297
    %v1300 = vtanh.pop %v1299
    %1302 = vrot.lane.b32.xlu0 %v1300, 64
    %v1303 = vpop.permute.xlu0 %1302
    %v1305 = vmul.f32 %v1287, %v1303
    %1307 = vrot.lane.b32.xlu0 %v1305, 32
    %v1308 = vpop.permute.xlu0 %1307
    %v1309 = vsel %vm187, %v1308, 0
    %1311 = vmatprep.subr.mxu0 0.0
    %1312 = vmatpush1.msra.mxu0 %v990
    %1313 = vmatprep.subr.mxu0 0.0
    %1314 = vmatpush1.msra.mxu0 %v991
    %1315 = vmatprep.subr.mxu0 0.0
    %1316 = vmatpush1.msra.mxu0 %v992
    %1317 = vmatprep.subr.mxu0 0.0
    %1318 = vmatpush1.msra.mxu0 %v993
    %1319 = vmatprep.subr.mxu0 0.0
    %1320 = vmatpush1.msra.mxu0 0.0
    %1321 = vmatprep.subr.mxu0 0.0
    %1322 = vmatpush1.msra.mxu0 0.0
    %1323 = vmatprep.subr.mxu0 0.0
    %1324 = vmatpush1.msra.mxu0 0.0
    %1325 = vmatprep.subr.mxu0 0.0
    %1326 = vmatpush1.msra.mxu0 0.0
    %1327 = vmatprep.subr.mxu0 0.0
    %1328 = vmatpush1.msra.mxu0 0.0
    %1329 = vmatprep.subr.mxu0 0.0
    %1330 = vmatpush1.msra.mxu0 0.0
    %1331 = vmatprep.subr.mxu0 0.0
    %1332 = vmatpush1.msra.mxu0 0.0
    %1333 = vmatprep.subr.mxu0 0.0
    %1334 = vmatpush1.msra.mxu0 0.0
    %1335 = vmatprep.subr.mxu0 0.0
    %1336 = vmatpush1.msra.mxu0 0.0
    %1337 = vmatprep.subr.mxu0 0.0
    %1338 = vmatpush1.msra.mxu0 0.0
    %1339 = vmatprep.subr.mxu0 0.0
    %1340 = vmatpush1.msra.mxu0 0.0
    %1341 = vmatprep.subr.mxu0 0.0
    %1342 = vmatpush1.msra.mxu0 0.0
    %1343 = vmatprep.subr.mxu0 0.0
    %1344 = vmatpush1.msra.mxu0 0.0
    %1345 = vmatprep.subr.mxu0 0.0
    %1346 = vmatpush1.msra.mxu0 0.0
    %1347 = vmatprep.subr.mxu0 0.0
    %1348 = vmatpush1.msra.mxu0 0.0
    %1349 = vmatprep.subr.mxu0 0.0
    %1350 = vmatpush1.msra.mxu0 0.0
    %1351 = vmatprep.subr.mxu0 0.0
    %1352 = vmatpush1.msra.mxu0 0.0
    %1353 = vmatprep.subr.mxu0 0.0
    %1354 = vmatpush1.msra.mxu0 0.0
    %1355 = vmatprep.subr.mxu0 0.0
    %1356 = vmatpush1.msra.mxu0 0.0
    %1357 = vmatprep.subr.mxu0 0.0
    %1358 = vmatpush1.msra.mxu0 0.0
    %1359 = vmatprep.subr.mxu0 0.0
    %1360 = vmatpush1.msra.mxu0 0.0
    %1361 = vmatprep.subr.mxu0 0.0
    %1362 = vmatpush1.msra.mxu0 0.0
    %1363 = vmatprep.subr.mxu0 0.0
    %1364 = vmatpush1.msra.mxu0 0.0
    %1365 = vmatprep.subr.mxu0 0.0
    %1366 = vmatpush1.msra.mxu0 0.0
    %1367 = vmatprep.subr.mxu0 0.0
    %1368 = vmatpush1.msra.mxu0 0.0
    %1369 = vmatprep.subr.mxu0 0.0
    %1370 = vmatpush1.msra.mxu0 0.0
    %1371 = vmatprep.subr.mxu0 0.0
    %1372 = vmatpush1.msra.mxu0 0.0
    %1373 = vmatprep.subr.mxu0 0.0
    %1374 = vmatpush1.msra.mxu0 0.0
    %1375 = vmatprep.mubr.f32.mxu0 0.0
    %1376 = vmatmul.mubr.f32.gmra.mrb[0].mxu0 %v1309
    %v1377 = vpop.f32.mrb[0].mxu0
    %v1378 = vadd.f32 0.0, %v1377
    %v1379 = vpop.f32.mrb[0].mxu0
    %1380 = vdwg.mxu0
    %v1381 = vadd.f32 %v1083, %v1378
    %v1382 = vxor.u32 %v1381, 2147483648
    %v1383 = vmul.f32 %v1382, 1.442695
    %v1384 = vpow.pop %v1383
    %v1385 = vadd.f32 %v1384, 1.0
    %v1386 = vrcp.pop %v1385
    %v1387 = vmul.f32 1.0, %v1386
    %v1388 = vtanh.pop %v1381
    %v1389 = vmul.f32 %v1387, %v1299
    %1391 = vrot.lane.b32.xlu0 %v1388, 64
    %v1392 = vpop.permute.xlu0 %1391
    %v1394 = vmul.f32 %v1387, %v1392
    %1396 = vrot.lane.b32.xlu0 %v1394, 32
    %v1397 = vpop.permute.xlu0 %1396
    %v1399 = vadd.f32 %v1389, %v1397
    %v1400 = vtanh.pop %v1399
    %1402 = vrot.lane.b32.xlu0 %v1400, 64
    %v1403 = vpop.permute.xlu0 %1402
    %v1405 = vmul.f32 %v1387, %v1403
    %1407 = vrot.lane.b32.xlu0 %v1405, 32
    %v1408 = vpop.permute.xlu0 %1407
    %v1409 = vsel %vm187, %v1408, 0
    %1411 = vmatprep.subr.mxu0 0.0
    %1412 = vmatpush1.msra.mxu0 %v990
    %1413 = vmatprep.subr.mxu0 0.0
    %1414 = vmatpush1.msra.mxu0 %v991
    %1415 = vmatprep.subr.mxu0 0.0
    %1416 = vmatpush1.msra.mxu0 %v992
    %1417 = vmatprep.subr.mxu0 0.0
    %1418 = vmatpush1.msra.mxu0 %v993
    %1419 = vmatprep.subr.mxu0 0.0
    %1420 = vmatpush1.msra.mxu0 0.0
    %1421 = vmatprep.subr.mxu0 0.0
    %1422 = vmatpush1.msra.mxu0 0.0
    %1423 = vmatprep.subr.mxu0 0.0
    %1424 = vmatpush1.msra.mxu0 0.0
    %1425 = vmatprep.subr.mxu0 0.0
    %1426 = vmatpush1.msra.mxu0 0.0
    %1427 = vmatprep.subr.mxu0 0.0
    %1428 = vmatpush1.msra.mxu0 0.0
    %1429 = vmatprep.subr.mxu0 0.0
    %1430 = vmatpush1.msra.mxu0 0.0
    %1431 = vmatprep.subr.mxu0 0.0
    %1432 = vmatpush1.msra.mxu0 0.0
    %1433 = vmatprep.subr.mxu0 0.0
    %1434 = vmatpush1.msra.mxu0 0.0
    %1435 = vmatprep.subr.mxu0 0.0
    %1436 = vmatpush1.msra.mxu0 0.0
    %1437 = vmatprep.subr.mxu0 0.0
    %1438 = vmatpush1.msra.mxu0 0.0
    %1439 = vmatprep.subr.mxu0 0.0
    %1440 = vmatpush1.msra.mxu0 0.0
    %1441 = vmatprep.subr.mxu0 0.0
    %1442 = vmatpush1.msra.mxu0 0.0
    %1443 = vmatprep.subr.mxu0 0.0
    %1444 = vmatpush1.msra.mxu0 0.0
    %1445 = vmatprep.subr.mxu0 0.0
    %1446 = vmatpush1.msra.mxu0 0.0
    %1447 = vmatprep.subr.mxu0 0.0
    %1448 = vmatpush1.msra.mxu0 0.0
    %1449 = vmatprep.subr.mxu0 0.0
    %1450 = vmatpush1.msra.mxu0 0.0
    %1451 = vmatprep.subr.mxu0 0.0
    %1452 = vmatpush1.msra.mxu0 0.0
    %1453 = vmatprep.subr.mxu0 0.0
    %1454 = vmatpush1.msra.mxu0 0.0
    %1455 = vmatprep.subr.mxu0 0.0
    %1456 = vmatpush1.msra.mxu0 0.0
    %1457 = vmatprep.subr.mxu0 0.0
    %1458 = vmatpush1.msra.mxu0 0.0
    %1459 = vmatprep.subr.mxu0 0.0
    %1460 = vmatpush1.msra.mxu0 0.0
    %1461 = vmatprep.subr.mxu0 0.0
    %1462 = vmatpush1.msra.mxu0 0.0
    %1463 = vmatprep.subr.mxu0 0.0
    %1464 = vmatpush1.msra.mxu0 0.0
    %1465 = vmatprep.subr.mxu0 0.0
    %1466 = vmatpush1.msra.mxu0 0.0
    %1467 = vmatprep.subr.mxu0 0.0
    %1468 = vmatpush1.msra.mxu0 0.0
    %1469 = vmatprep.subr.mxu0 0.0
    %1470 = vmatpush1.msra.mxu0 0.0
    %1471 = vmatprep.subr.mxu0 0.0
    %1472 = vmatpush1.msra.mxu0 0.0
    %1473 = vmatprep.subr.mxu0 0.0
    %1474 = vmatpush1.msra.mxu0 0.0
    %1475 = vmatprep.mubr.f32.mxu0 0.0
    %1476 = vmatmul.mubr.f32.gmra.mrb[0].mxu0 %v1409
    %v1477 = vpop.f32.mrb[0].mxu0
    %v1478 = vadd.f32 0.0, %v1477
    %v1479 = vpop.f32.mrb[0].mxu0
    %1480 = vdwg.mxu0
    %v1481 = vadd.f32 %v1088, %v1478
    %v1482 = vxor.u32 %v1481, 2147483648
    %v1483 = vmul.f32 %v1482, 1.442695
    %v1484 = vpow.pop %v1483
    %v1485 = vadd.f32 %v1484, 1.0
    %v1486 = vrcp.pop %v1485
    %v1487 = vmul.f32 1.0, %v1486
    %v1488 = vtanh.pop %v1481
    %v1489 = vmul.f32 %v1487, %v1399
    %1491 = vrot.lane.b32.xlu0 %v1488, 64
    %v1492 = vpop.permute.xlu0 %1491
    %v1494 = vmul.f32 %v1487, %v1492
    %1496 = vrot.lane.b32.xlu0 %v1494, 32
    %v1497 = vpop.permute.xlu0 %1496
    %v1499 = vadd.f32 %v1489, %v1497
    %v1500 = vtanh.pop %v1499
    %1502 = vrot.lane.b32.xlu0 %v1500, 64
    %v1503 = vpop.permute.xlu0 %1502
    %v1505 = vmul.f32 %v1487, %v1503
    %1507 = vrot.lane.b32.xlu0 %v1505, 32
    %v1508 = vpop.permute.xlu0 %1507
    %v1509 = vsel %vm187, %v1508, 0
    %1511 = vmatprep.subr.mxu0 0.0
    %1512 = vmatpush1.msra.mxu0 %v990
    %1513 = vmatprep.subr.mxu0 0.0
    %1514 = vmatpush1.msra.mxu0 %v991
    %1515 = vmatprep.subr.mxu0 0.0
    %1516 = vmatpush1.msra.mxu0 %v992
    %1517 = vmatprep.subr.mxu0 0.0
    %1518 = vmatpush1.msra.mxu0 %v993
    %1519 = vmatprep.subr.mxu0 0.0
    %1520 = vmatpush1.msra.mxu0 0.0
    %1521 = vmatprep.subr.mxu0 0.0
    %1522 = vmatpush1.msra.mxu0 0.0
    %1523 = vmatprep.subr.mxu0 0.0
    %1524 = vmatpush1.msra.mxu0 0.0
    %1525 = vmatprep.subr.mxu0 0.0
    %1526 = vmatpush1.msra.mxu0 0.0
    %1527 = vmatprep.subr.mxu0 0.0
    %1528 = vmatpush1.msra.mxu0 0.0
    %1529 = vmatprep.subr.mxu0 0.0
    %1530 = vmatpush1.msra.mxu0 0.0
    %1531 = vmatprep.subr.mxu0 0.0
    %1532 = vmatpush1.msra.mxu0 0.0
    %1533 = vmatprep.subr.mxu0 0.0
    %1534 = vmatpush1.msra.mxu0 0.0
    %1535 = vmatprep.subr.mxu0 0.0
    %1536 = vmatpush1.msra.mxu0 0.0
    %1537 = vmatprep.subr.mxu0 0.0
    %1538 = vmatpush1.msra.mxu0 0.0
    %1539 = vmatprep.subr.mxu0 0.0
    %1540 = vmatpush1.msra.mxu0 0.0
    %1541 = vmatprep.subr.mxu0 0.0
    %1542 = vmatpush1.msra.mxu0 0.0
    %1543 = vmatprep.subr.mxu0 0.0
    %1544 = vmatpush1.msra.mxu0 0.0
    %1545 = vmatprep.subr.mxu0 0.0
    %1546 = vmatpush1.msra.mxu0 0.0
    %1547 = vmatprep.subr.mxu0 0.0
    %1548 = vmatpush1.msra.mxu0 0.0
    %1549 = vmatprep.subr.mxu0 0.0
    %1550 = vmatpush1.msra.mxu0 0.0
    %1551 = vmatprep.subr.mxu0 0.0
    %1552 = vmatpush1.msra.mxu0 0.0
    %1553 = vmatprep.subr.mxu0 0.0
    %1554 = vmatpush1.msra.mxu0 0.0
    %1555 = vmatprep.subr.mxu0 0.0
    %1556 = vmatpush1.msra.mxu0 0.0
    %1557 = vmatprep.subr.mxu0 0.0
    %1558 = vmatpush1.msra.mxu0 0.0
    %1559 = vmatprep.subr.mxu0 0.0
    %1560 = vmatpush1.msra.mxu0 0.0
    %1561 = vmatprep.subr.mxu0 0.0
    %1562 = vmatpush1.msra.mxu0 0.0
    %1563 = vmatprep.subr.mxu0 0.0
    %1564 = vmatpush1.msra.mxu0 0.0
    %1565 = vmatprep.subr.mxu0 0.0
    %1566 = vmatpush1.msra.mxu0 0.0
    %1567 = vmatprep.subr.mxu0 0.0
    %1568 = vmatpush1.msra.mxu0 0.0
    %1569 = vmatprep.subr.mxu0 0.0
    %1570 = vmatpush1.msra.mxu0 0.0
    %1571 = vmatprep.subr.mxu0 0.0
    %1572 = vmatpush1.msra.mxu0 0.0
    %1573 = vmatprep.subr.mxu0 0.0
    %1574 = vmatpush1.msra.mxu0 0.0
    %1575 = vmatprep.mubr.f32.mxu0 0.0
    %1576 = vmatmul.mubr.f32.gmra.mrb[0].mxu0 %v1509
    %v1577 = vpop.f32.mrb[0].mxu0
    %v1578 = vadd.f32 0.0, %v1577
    %v1579 = vpop.f32.mrb[0].mxu0
    %1580 = vdwg.mxu0
    %v1581 = vadd.f32 %v1093, %v1578
    %v1582 = vxor.u32 %v1581, 2147483648
    %v1583 = vmul.f32 %v1582, 1.442695
    %v1584 = vpow.pop %v1583
    %v1585 = vadd.f32 %v1584, 1.0
    %v1586 = vrcp.pop %v1585
    %v1587 = vmul.f32 1.0, %v1586
    %v1588 = vtanh.pop %v1581
    %v1589 = vmul.f32 %v1587, %v1499
    %1591 = vrot.lane.b32.xlu0 %v1588, 64
    %v1592 = vpop.permute.xlu0 %1591
    %v1594 = vmul.f32 %v1587, %v1592
    %1596 = vrot.lane.b32.xlu0 %v1594, 32
    %v1597 = vpop.permute.xlu0 %1596
    %v1599 = vadd.f32 %v1589, %v1597
    %v1600 = vtanh.pop %v1599
    %1602 = vrot.lane.b32.xlu0 %v1600, 64
    %v1603 = vpop.permute.xlu0 %1602
    %v1605 = vmul.f32 %v1587, %v1603
    %1607 = vrot.lane.b32.xlu0 %v1605, 32
    %v1608 = vpop.permute.xlu0 %1607
    %v1609 = vsel %vm187, %v1608, 0
    %1611 = vmatprep.subr.mxu0 0.0
    %1612 = vmatpush1.msra.mxu0 %v990
    %1613 = vmatprep.subr.mxu0 0.0
    %1614 = vmatpush1.msra.mxu0 %v991
    %1615 = vmatprep.subr.mxu0 0.0
    %1616 = vmatpush1.msra.mxu0 %v992
    %1617 = vmatprep.subr.mxu0 0.0
    %1618 = vmatpush1.msra.mxu0 %v993
    %1619 = vmatprep.subr.mxu0 0.0
    %1620 = vmatpush1.msra.mxu0 0.0
    %1621 = vmatprep.subr.mxu0 0.0
    %1622 = vmatpush1.msra.mxu0 0.0
    %1623 = vmatprep.subr.mxu0 0.0
    %1624 = vmatpush1.msra.mxu0 0.0
    %1625 = vmatprep.subr.mxu0 0.0
    %1626 = vmatpush1.msra.mxu0 0.0
    %1627 = vmatprep.subr.mxu0 0.0
    %1628 = vmatpush1.msra.mxu0 0.0
    %1629 = vmatprep.subr.mxu0 0.0
    %1630 = vmatpush1.msra.mxu0 0.0
    %1631 = vmatprep.subr.mxu0 0.0
    %1632 = vmatpush1.msra.mxu0 0.0
    %1633 = vmatprep.subr.mxu0 0.0
    %1634 = vmatpush1.msra.mxu0 0.0
    %1635 = vmatprep.subr.mxu0 0.0
    %1636 = vmatpush1.msra.mxu0 0.0
    %1637 = vmatprep.subr.mxu0 0.0
    %1638 = vmatpush1.msra.mxu0 0.0
    %1639 = vmatprep.subr.mxu0 0.0
    %1640 = vmatpush1.msra.mxu0 0.0
    %1641 = vmatprep.subr.mxu0 0.0
    %1642 = vmatpush1.msra.mxu0 0.0
    %1643 = vmatprep.subr.mxu0 0.0
    %1644 = vmatpush1.msra.mxu0 0.0
    %1645 = vmatprep.subr.mxu0 0.0
    %1646 = vmatpush1.msra.mxu0 0.0
    %1647 = vmatprep.subr.mxu0 0.0
    %1648 = vmatpush1.msra.mxu0 0.0
    %1649 = vmatprep.subr.mxu0 0.0
    %1650 = vmatpush1.msra.mxu0 0.0
    %1651 = vmatprep.subr.mxu0 0.0
    %1652 = vmatpush1.msra.mxu0 0.0
    %1653 = vmatprep.subr.mxu0 0.0
    %1654 = vmatpush1.msra.mxu0 0.0
    %1655 = vmatprep.subr.mxu0 0.0
    %1656 = vmatpush1.msra.mxu0 0.0
    %1657 = vmatprep.subr.mxu0 0.0
    %1658 = vmatpush1.msra.mxu0 0.0
    %1659 = vmatprep.subr.mxu0 0.0
    %1660 = vmatpush1.msra.mxu0 0.0
    %1661 = vmatprep.subr.mxu0 0.0
    %1662 = vmatpush1.msra.mxu0 0.0
    %1663 = vmatprep.subr.mxu0 0.0
    %1664 = vmatpush1.msra.mxu0 0.0
    %1665 = vmatprep.subr.mxu0 0.0
    %1666 = vmatpush1.msra.mxu0 0.0
    %1667 = vmatprep.subr.mxu0 0.0
    %1668 = vmatpush1.msra.mxu0 0.0
    %1669 = vmatprep.subr.mxu0 0.0
    %1670 = vmatpush1.msra.mxu0 0.0
    %1671 = vmatprep.subr.mxu0 0.0
    %1672 = vmatpush1.msra.mxu0 0.0
    %1673 = vmatprep.subr.mxu0 0.0
    %1674 = vmatpush1.msra.mxu0 0.0
    %1675 = vmatprep.mubr.f32.mxu0 0.0
    %1676 = vmatmul.mubr.f32.gmra.mrb[0].mxu0 %v1609
    %v1677 = vpop.f32.mrb[0].mxu0
    %v1678 = vadd.f32 0.0, %v1677
    %v1679 = vpop.f32.mrb[0].mxu0
    %1680 = vdwg.mxu0
    %v1681 = vadd.f32 %v1098, %v1678
    %v1682 = vxor.u32 %v1681, 2147483648
    %v1683 = vmul.f32 %v1682, 1.442695
    %v1684 = vpow.pop %v1683
    %v1685 = vadd.f32 %v1684, 1.0
    %v1686 = vrcp.pop %v1685
    %v1687 = vmul.f32 1.0, %v1686
    %v1688 = vtanh.pop %v1681
    %v1689 = vmul.f32 %v1687, %v1599
    %1691 = vrot.lane.b32.xlu0 %v1688, 64
    %v1692 = vpop.permute.xlu0 %1691
    %v1694 = vmul.f32 %v1687, %v1692
    %1696 = vrot.lane.b32.xlu0 %v1694, 32
    %v1697 = vpop.permute.xlu0 %1696
    %v1699 = vadd.f32 %v1689, %v1697
    %v1700 = vtanh.pop %v1699
    %1702 = vrot.lane.b32.xlu0 %v1700, 64
    %v1703 = vpop.permute.xlu0 %1702
    %v1705 = vmul.f32 %v1687, %v1703
    %1707 = vrot.lane.b32.xlu0 %v1705, 32
    %v1708 = vpop.permute.xlu0 %1707
    %v1709 = vsel %vm187, %v1708, 0
    %1711 = vmatprep.subr.mxu0 0.0
    %1712 = vmatpush1.msra.mxu0 %v990
    %1713 = vmatprep.subr.mxu0 0.0
    %1714 = vmatpush1.msra.mxu0 %v991
    %1715 = vmatprep.subr.mxu0 0.0
    %1716 = vmatpush1.msra.mxu0 %v992
    %1717 = vmatprep.subr.mxu0 0.0
    %1718 = vmatpush1.msra.mxu0 %v993
    %1719 = vmatprep.subr.mxu0 0.0
    %1720 = vmatpush1.msra.mxu0 0.0
    %1721 = vmatprep.subr.mxu0 0.0
    %1722 = vmatpush1.msra.mxu0 0.0
    %1723 = vmatprep.subr.mxu0 0.0
    %1724 = vmatpush1.msra.mxu0 0.0
    %1725 = vmatprep.subr.mxu0 0.0
    %1726 = vmatpush1.msra.mxu0 0.0
    %1727 = vmatprep.subr.mxu0 0.0
    %1728 = vmatpush1.msra.mxu0 0.0
    %1729 = vmatprep.subr.mxu0 0.0
    %1730 = vmatpush1.msra.mxu0 0.0
    %1731 = vmatprep.subr.mxu0 0.0
    %1732 = vmatpush1.msra.mxu0 0.0
    %1733 = vmatprep.subr.mxu0 0.0
    %1734 = vmatpush1.msra.mxu0 0.0
    %1735 = vmatprep.subr.mxu0 0.0
    %1736 = vmatpush1.msra.mxu0 0.0
    %1737 = vmatprep.subr.mxu0 0.0
    %1738 = vmatpush1.msra.mxu0 0.0
    %1739 = vmatprep.subr.mxu0 0.0
    %1740 = vmatpush1.msra.mxu0 0.0
    %1741 = vmatprep.subr.mxu0 0.0
    %1742 = vmatpush1.msra.mxu0 0.0
    %1743 = vmatprep.subr.mxu0 0.0
    %1744 = vmatpush1.msra.mxu0 0.0
    %1745 = vmatprep.subr.mxu0 0.0
    %1746 = vmatpush1.msra.mxu0 0.0
    %1747 = vmatprep.subr.mxu0 0.0
    %1748 = vmatpush1.msra.mxu0 0.0
    %1749 = vmatprep.subr.mxu0 0.0
    %1750 = vmatpush1.msra.mxu0 0.0
    %1751 = vmatprep.subr.mxu0 0.0
    %1752 = vmatpush1.msra.mxu0 0.0
    %1753 = vmatprep.subr.mxu0 0.0
    %1754 = vmatpush1.msra.mxu0 0.0
    %1755 = vmatprep.subr.mxu0 0.0
    %1756 = vmatpush1.msra.mxu0 0.0
    %1757 = vmatprep.subr.mxu0 0.0
    %1758 = vmatpush1.msra.mxu0 0.0
    %1759 = vmatprep.subr.mxu0 0.0
    %1760 = vmatpush1.msra.mxu0 0.0
    %1761 = vmatprep.subr.mxu0 0.0
    %1762 = vmatpush1.msra.mxu0 0.0
    %1763 = vmatprep.subr.mxu0 0.0
    %1764 = vmatpush1.msra.mxu0 0.0
    %1765 = vmatprep.subr.mxu0 0.0
    %1766 = vmatpush1.msra.mxu0 0.0
    %1767 = vmatprep.subr.mxu0 0.0
    %1768 = vmatpush1.msra.mxu0 0.0
    %1769 = vmatprep.subr.mxu0 0.0
    %1770 = vmatpush1.msra.mxu0 0.0
    %1771 = vmatprep.subr.mxu0 0.0
    %1772 = vmatpush1.msra.mxu0 0.0
    %1773 = vmatprep.subr.mxu0 0.0
    %1774 = vmatpush1.msra.mxu0 0.0
    %1775 = vmatprep.mubr.f32.mxu0 0.0
    %1776 = vmatmul.mubr.f32.gmra.mrb[0].mxu0 %v1709
    %v1777 = vpop.f32.mrb[0].mxu0
    %v1778 = vadd.f32 0.0, %v1777
    %v1779 = vpop.f32.mrb[0].mxu0
    %1780 = vdwg.mxu0
    %v1781 = vadd.f32 %v1103, %v1778
    %v1782 = vxor.u32 %v1781, 2147483648
    %v1783 = vmul.f32 %v1782, 1.442695
    %v1784 = vpow.pop %v1783
    %v1785 = vadd.f32 %v1784, 1.0
    %v1786 = vrcp.pop %v1785
    %v1787 = vmul.f32 1.0, %v1786
    %v1788 = vtanh.pop %v1781
    %v1789 = vmul.f32 %v1787, %v1699
    %1791 = vrot.lane.b32.xlu0 %v1788, 64
    %v1792 = vpop.permute.xlu0 %1791
    %v1794 = vmul.f32 %v1787, %v1792
    %1796 = vrot.lane.b32.xlu0 %v1794, 32
    %v1797 = vpop.permute.xlu0 %1796
    %v1799 = vadd.f32 %v1789, %v1797
    %v1800 = vtanh.pop %v1799
    %1802 = vrot.lane.b32.xlu0 %v1800, 64
    %v1803 = vpop.permute.xlu0 %1802
    %v1805 = vmul.f32 %v1787, %v1803
    %1807 = vrot.lane.b32.xlu0 %v1805, 32
    %v1808 = vpop.permute.xlu0 %1807
    %v1809 = vsel %vm187, %v1808, 0
    %1811 = vmatprep.subr.mxu0 0.0
    %1812 = vmatpush1.msra.mxu0 %v990
    %1813 = vmatprep.subr.mxu0 0.0
    %1814 = vmatpush1.msra.mxu0 %v991
    %1815 = vmatprep.subr.mxu0 0.0
    %1816 = vmatpush1.msra.mxu0 %v992
    %1817 = vmatprep.subr.mxu0 0.0
    %1818 = vmatpush1.msra.mxu0 %v993
    %1819 = vmatprep.subr.mxu0 0.0
    %1820 = vmatpush1.msra.mxu0 0.0
    %1821 = vmatprep.subr.mxu0 0.0
    %1822 = vmatpush1.msra.mxu0 0.0
    %1823 = vmatprep.subr.mxu0 0.0
    %1824 = vmatpush1.msra.mxu0 0.0
    %1825 = vmatprep.subr.mxu0 0.0
    %1826 = vmatpush1.msra.mxu0 0.0
    %1827 = vmatprep.subr.mxu0 0.0
    %1828 = vmatpush1.msra.mxu0 0.0
    %1829 = vmatprep.subr.mxu0 0.0
    %1830 = vmatpush1.msra.mxu0 0.0
    %1831 = vmatprep.subr.mxu0 0.0
    %1832 = vmatpush1.msra.mxu0 0.0
    %1833 = vmatprep.subr.mxu0 0.0
    %1834 = vmatpush1.msra.mxu0 0.0
    %1835 = vmatprep.subr.mxu0 0.0
    %1836 = vmatpush1.msra.mxu0 0.0
    %1837 = vmatprep.subr.mxu0 0.0
    %1838 = vmatpush1.msra.mxu0 0.0
    %1839 = vmatprep.subr.mxu0 0.0
    %1840 = vmatpush1.msra.mxu0 0.0
    %1841 = vmatprep.subr.mxu0 0.0
    %1842 = vmatpush1.msra.mxu0 0.0
    %1843 = vmatprep.subr.mxu0 0.0
    %1844 = vmatpush1.msra.mxu0 0.0
    %1845 = vmatprep.subr.mxu0 0.0
    %1846 = vmatpush1.msra.mxu0 0.0
    %1847 = vmatprep.subr.mxu0 0.0
    %1848 = vmatpush1.msra.mxu0 0.0
    %1849 = vmatprep.subr.mxu0 0.0
    %1850 = vmatpush1.msra.mxu0 0.0
    %1851 = vmatprep.subr.mxu0 0.0
    %1852 = vmatpush1.msra.mxu0 0.0
    %1853 = vmatprep.subr.mxu0 0.0
    %1854 = vmatpush1.msra.mxu0 0.0
    %1855 = vmatprep.subr.mxu0 0.0
    %1856 = vmatpush1.msra.mxu0 0.0
    %1857 = vmatprep.subr.mxu0 0.0
    %1858 = vmatpush1.msra.mxu0 0.0
    %1859 = vmatprep.subr.mxu0 0.0
    %1860 = vmatpush1.msra.mxu0 0.0
    %1861 = vmatprep.subr.mxu0 0.0
    %1862 = vmatpush1.msra.mxu0 0.0
    %1863 = vmatprep.subr.mxu0 0.0
    %1864 = vmatpush1.msra.mxu0 0.0
    %1865 = vmatprep.subr.mxu0 0.0
    %1866 = vmatpush1.msra.mxu0 0.0
    %1867 = vmatprep.subr.mxu0 0.0
    %1868 = vmatpush1.msra.mxu0 0.0
    %1869 = vmatprep.subr.mxu0 0.0
    %1870 = vmatpush1.msra.mxu0 0.0
    %1871 = vmatprep.subr.mxu0 0.0
    %1872 = vmatpush1.msra.mxu0 0.0
    %1873 = vmatprep.subr.mxu0 0.0
    %1874 = vmatpush1.msra.mxu0 0.0
    %1875 = vmatprep.mubr.f32.mxu0 0.0
    %1876 = vmatmul.mubr.f32.gmra.mrb[0].mxu0 %v1809
    %v1877 = vpop.f32.mrb[0].mxu0
    %v1878 = vadd.f32 0.0, %v1877
    %v1879 = vpop.f32.mrb[0].mxu0
    %1880 = vdwg.mxu0
    %v1881 = vadd.f32 %v1108, %v1878
    %v1882 = vxor.u32 %v1881, 2147483648
    %v1883 = vmul.f32 %v1882, 1.442695
    %v1884 = vpow.pop %v1883
    %v1885 = vadd.f32 %v1884, 1.0
    %v1886 = vrcp.pop %v1885
    %v1887 = vmul.f32 1.0, %v1886
    %v1888 = vtanh.pop %v1881
    %v1889 = vmul.f32 %v1887, %v1799
    %1891 = vrot.lane.b32.xlu0 %v1888, 64
    %v1892 = vpop.permute.xlu0 %1891
    %v1894 = vmul.f32 %v1887, %v1892
    %1896 = vrot.lane.b32.xlu0 %v1894, 32
    %v1897 = vpop.permute.xlu0 %1896
    %v1899 = vadd.f32 %v1889, %v1897
    %v1900 = vtanh.pop %v1899
    %1902 = vrot.lane.b32.xlu0 %v1900, 64
    %v1903 = vpop.permute.xlu0 %1902
    %v1905 = vmul.f32 %v1887, %v1903
    %v1906 = vld [vmem:[%s9] sm:$0xff]
    %1908 = vset.pattern.permute.xlu0 0
    %1909 = vperm.xlu0 %1908, %v1906
    %v1910 = vpop.permute.xlu0 %1909
    %v1912 = vmul.f32 %v1905, %v1910
    %v1913 = vld [vmem:[%s7] sm:$0xff]
    %v1914 = vld [vmem:[%s7 + $0x8] sm:$0xff]
    %v1915 = vld [vmem:[%s7 + $0x10] sm:$0xff]
    %v1916 = vld [vmem:[%s7 + $0x18] sm:$0xff]
    %v1917 = vld [vmem:[%s8] sm:$0x1]
    %v1919 = vlaneseq
    %v1920 = vshrl.u32 %v1919, 7
    %v1921 = vsub.s32 0, %v1920
    %v1922 = vrot.slane %v1917, %v1921
    %1925 = vrot.lane.b32.xlu0 %v1912, 32
    %v1926 = vpop.permute.xlu0 %1925
    %v1927 = vsel %vm187, %v1926, 0
    %1929 = vmatprep.subr.mxu0 0.0
    %1930 = vmatpush1.msra.mxu0 %v1913
    %1931 = vmatprep.subr.mxu0 0.0
    %1932 = vmatpush1.msra.mxu0 %v1914
    %1933 = vmatprep.subr.mxu0 0.0
    %1934 = vmatpush1.msra.mxu0 %v1915
    %1935 = vmatprep.subr.mxu0 0.0
    %1936 = vmatpush1.msra.mxu0 %v1916
    %1937 = vmatprep.subr.mxu0 0.0
    %1938 = vmatpush1.msra.mxu0 0.0
    %1939 = vmatprep.subr.mxu0 0.0
    %1940 = vmatpush1.msra.mxu0 0.0
    %1941 = vmatprep.subr.mxu0 0.0
    %1942 = vmatpush1.msra.mxu0 0.0
    %1943 = vmatprep.subr.mxu0 0.0
    %1944 = vmatpush1.msra.mxu0 0.0
    %1945 = vmatprep.subr.mxu0 0.0
    %1946 = vmatpush1.msra.mxu0 0.0
    %1947 = vmatprep.subr.mxu0 0.0
    %1948 = vmatpush1.msra.mxu0 0.0
    %1949 = vmatprep.subr.mxu0 0.0
    %1950 = vmatpush1.msra.mxu0 0.0
    %1951 = vmatprep.subr.mxu0 0.0
    %1952 = vmatpush1.msra.mxu0 0.0
    %1953 = vmatprep.subr.mxu0 0.0
    %1954 = vmatpush1.msra.mxu0 0.0
    %1955 = vmatprep.subr.mxu0 0.0
    %1956 = vmatpush1.msra.mxu0 0.0
    %1957 = vmatprep.subr.mxu0 0.0
    %1958 = vmatpush1.msra.mxu0 0.0
    %1959 = vmatprep.subr.mxu0 0.0
    %1960 = vmatpush1.msra.mxu0 0.0
    %1961 = vmatprep.subr.mxu0 0.0
    %1962 = vmatpush1.msra.mxu0 0.0
    %1963 = vmatprep.subr.mxu0 0.0
    %1964 = vmatpush1.msra.mxu0 0.0
    %1965 = vmatprep.subr.mxu0 0.0
    %1966 = vmatpush1.msra.mxu0 0.0
    %1967 = vmatprep.subr.mxu0 0.0
    %1968 = vmatpush1.msra.mxu0 0.0
    %1969 = vmatprep.subr.mxu0 0.0
    %1970 = vmatpush1.msra.mxu0 0.0
    %1971 = vmatprep.subr.mxu0 0.0
    %1972 = vmatpush1.msra.mxu0 0.0
    %1973 = vmatprep.subr.mxu0 0.0
    %1974 = vmatpush1.msra.mxu0 0.0
    %1975 = vmatprep.subr.mxu0 0.0
    %1976 = vmatpush1.msra.mxu0 0.0
    %1977 = vmatprep.subr.mxu0 0.0
    %1978 = vmatpush1.msra.mxu0 0.0
    %1979 = vmatprep.subr.mxu0 0.0
    %1980 = vmatpush1.msra.mxu0 0.0
    %1981 = vmatprep.subr.mxu0 0.0
    %1982 = vmatpush1.msra.mxu0 0.0
    %1983 = vmatprep.subr.mxu0 0.0
    %1984 = vmatpush1.msra.mxu0 0.0
    %1985 = vmatprep.subr.mxu0 0.0
    %1986 = vmatpush1.msra.mxu0 0.0
    %1987 = vmatprep.subr.mxu0 0.0
    %1988 = vmatpush1.msra.mxu0 0.0
    %1989 = vmatprep.subr.mxu0 0.0
    %1990 = vmatpush1.msra.mxu0 0.0
    %1991 = vmatprep.subr.mxu0 0.0
    %1992 = vmatpush1.msra.mxu0 0.0
    %1993 = vmatprep.mubr.f32.mxu0 0.0
    %1994 = vmatmul.mubr.f32.gmra.mrb[0].mxu0 %v1927
    %v1995 = vpop.f32.mrb[0].mxu0
    %v1996 = vadd.f32 %v1922, %v1995
    %v1997 = vpop.f32.mrb[0].mxu0
    %1998 = vdwg.mxu0
    %vm1999 = vcmask 80896
    %2000 = vst.msk [vmem:[#allocation2] sm:$0xff] %vm1999, %v1996
    // Predicated region
    $region42: #{tpu_custom_call.1} parent=1 // pred_check
      _
    $region43: #{tpu_custom_call.1} parent=1 // pred_check_branch
      %2002 = sbr.rel (0) target = $region45
    $region44: #{tpu_custom_call.1} parent=1 // pred_region
      %s2004 = ssub.s32 128, 128
      %2005 = vsyncadd [#allocation3], %s2004
      %s2007 = sshll.u32 [#allocation2], 4
      %s2008 = int_to_ptr.vmem [resolvable:$true] %s2007
      %2010 = dma.vmem_to_hbm [thread:$0]  %s2008, 128, %s10, [#allocation3]
    $region45: #{tpu_custom_call.1} parent=1 // pred_fallthru
      _
    // Predicated region
    $region46: #{tpu_custom_call.1} parent=1 // pred_check
      _
    $region47: #{tpu_custom_call.1} parent=1 // pred_check_branch
      %2012 = sbr.rel (0) target = $region49
    $region48: #{tpu_custom_call.1} parent=1 // pred_region
      %2013 = dma.done [#allocation3], 128
    $region49: #{tpu_custom_call.1} parent=1 // pred_fallthru
      _
    %2014 = vsyncpa [#allocation3], 1

</llo_original>
